<compile_context>
chip_gen: v5e
topology: v5e:2x2
jax: 0.10.0
libtpu: 0.0.40
codegen_flags: <defaults>
</compile_context>

<pallas_src>
import jax
import jax.numpy as jnp
from jax.experimental import pallas as pl
from jax.experimental.pallas import tpu as pltpu

# Config values from the module's default Config.
NUM_OF_WALKS = 80.0
BETA = 0.5
GAMMA = 0.5

# Problem sizes (shapes = (window_size, N, N), dimensions = 128 -> D/2 = 64).
WINDOW = 5
N_NODES = 256
HALF_DIM = 64
TILE_M = 128   # default row-block size; auto-shrunk if VMEM budget demands it


def _attention_walk_kernel(probs_ref, wtt_ref, adj_ref, left_ref, right_ref,
                           loss_part_ref):
    """One row-block: partial sum of |combined loss| for that block of rows."""
    n_windows = wtt_ref.shape[0]

    # wtm_scaled = (num_walks * N) * sum_w softmax(attn)[w] * wtt[w, block, :]
    # probs arrive pre-scaled from the wrapper; scalars live in SMEM.
    wtm = probs_ref[0] * wtt_ref[0]
    for w in range(1, n_windows):
        wtm = wtm + probs_ref[w] * wtt_ref[w]

    # left_block @ right on the MXU, f32 accumulation.
    dot = jnp.dot(left_ref[...], right_ref[...],
                  preferred_element_type=jnp.float32)

    # Numerically-stable softplus(-dot):
    #   -log(sigmoid(dot))     = sp
    #   -log(1 - sigmoid(dot)) = dot + sp
    sp = jnp.maximum(-dot, 0.0) + jnp.log(1.0 + jnp.exp(-jnp.abs(dot)))

    # adjacency streamed as bf16 ({0,1} exactly), upcast before the multiply.
    adj = adj_ref[...].astype(jnp.float32)

    combined = wtm * sp + adj * (dot + sp)
    loss_part = jnp.sum(jnp.abs(combined))   # abs kept for fidelity (no-op math-wise)

    # Broadcast the block scalar into an (8,128)-aligned tile so the store is a
    # plain unmasked vst; the wrapper reads element [:, 0, 0].
    loss_part_ref[...] = jnp.full(loss_part_ref.shape, loss_part, jnp.float32)


def _pick_tile_m(n_nodes, w_sz, half_dim, tile_m, vmem_budget_bytes=24 << 20):
    """Shrink tile_m until the double-buffered per-step footprint fits VMEM."""
    tile_m = min(tile_m, n_nodes)
    while tile_m > 8:
        per_step = 2 * (w_sz * tile_m * n_nodes * 4     # wtt (f32, double-buffered)
                        + tile_m * n_nodes * 2          # adjacency (bf16)
                        + tile_m * half_dim * 4)        # left_factors (f32)
        resident = half_dim * n_nodes * 4 + 2 * 8 * 128 * 4
        if per_step + resident <= vmem_budget_bytes and n_nodes % tile_m == 0:
            break
        tile_m //= 2
    assert n_nodes % tile_m == 0, "row-block size must divide N"
    return tile_m


def _grid_semantics(n_blocks):
    """CORE_PARALLEL on v7x (2 TC/chip) so row blocks actually split cores."""
    sem = "parallel"
    try:
        kind = jax.devices()[0].device_kind.lower()
        if "v7" in kind and n_blocks % 2 == 0:
            sem = pltpu.CORE_PARALLEL
    except Exception:
        pass
    return (sem,)


def attention_walk_forward(weighted_target_tensor, adjacency_opposite,
                           left_factors, right_factors, attention,
                           *, num_walks=NUM_OF_WALKS, beta=BETA, gamma=GAMMA,
                           tile_m=TILE_M):
    w_sz, n_nodes, _ = weighted_target_tensor.shape
    half_dim = left_factors.shape[1]
    tile_m = _pick_tile_m(n_nodes, w_sz, half_dim, tile_m)
    n_blocks = n_nodes // tile_m

    # Parameter-only glue (O(W)): softmax over the attention vector with the
    # constant (num_of_walks * N) folded in.
    probs = jax.nn.softmax(attention[:, 0], axis=0).astype(jnp.float32)
    scaled_probs = (num_walks * float(n_nodes)) * probs

    # Lossless traffic cut: adjacency values are exactly {0, 1}.
    adjacency_bf16 = adjacency_opposite.astype(jnp.bfloat16)

    cost = pl.CostEstimate(
        flops=int(2 * n_nodes * half_dim * n_nodes
                  + (2 * w_sz + 6) * n_nodes * n_nodes),
        transcendentals=int(2 * n_nodes * n_nodes),
        bytes_accessed=int(w_sz * n_nodes * n_nodes * 4    # wtt f32
                           + n_nodes * n_nodes * 2          # adjacency bf16
                           + n_nodes * half_dim * 4         # left f32
                           + half_dim * n_nodes * 4         # right f32
                           + n_blocks * 8 * 128 * 4),       # partial outputs
    )

    loss_parts = pl.pallas_call(
        _attention_walk_kernel,
        out_shape=jax.ShapeDtypeStruct((n_blocks, 8, 128), jnp.float32),
        grid=(n_blocks,),
        in_specs=[
            pl.BlockSpec(memory_space=pltpu.SMEM),                       # scaled probs (W,)
            pl.BlockSpec((w_sz, tile_m, n_nodes), lambda i: (0, i, 0)),  # wtt row-block
            pl.BlockSpec((tile_m, n_nodes), lambda i: (i, 0)),           # adjacency row-block
            pl.BlockSpec((tile_m, half_dim), lambda i: (i, 0)),          # left row-block
            pl.BlockSpec((half_dim, n_nodes), lambda i: (0, 0)),         # right (full, resident)
        ],
        out_specs=pl.BlockSpec((1, 8, 128), lambda i: (i, 0, 0)),
        compiler_params=pltpu.CompilerParams(
            dimension_semantics=_grid_semantics(n_blocks)),
        cost_estimate=cost,
    )(scaled_probs, weighted_target_tensor, adjacency_bf16,
      left_factors, right_factors)

    # Tiny finalization in plain JAX (parameter-only / per-block scalars).
    loss_on_matrices = jnp.sum(loss_parts[:, 0, 0]) / float(n_nodes * n_nodes)
    norms = jnp.mean(jnp.abs(left_factors)) + jnp.mean(jnp.abs(right_factors))
    loss_on_reg = beta * jnp.sum(attention ** 2)
    return loss_on_matrices + loss_on_reg + gamma * norms


def attention_walk_reference(weighted_target_tensor, adjacency_opposite,
                             left_factors, right_factors, attention,
                             *, num_walks=NUM_OF_WALKS, beta=BETA, gamma=GAMMA):
    """Pure-JAX mirror of the PyTorch forward, for correctness checking."""
    probs = jax.nn.softmax(attention, axis=0)                      # (W, 1)
    wtt = weighted_target_tensor * probs[:, :, None]
    wtm = jnp.sum(wtt, axis=0)                                     # (N, N)
    dot = left_factors @ right_factors
    sig = jax.nn.sigmoid(dot)
    loss_on_target = -wtm * jnp.log(sig)
    loss_opposite = -adjacency_opposite * jnp.log(1.0 - sig)
    loss_on_matrices = jnp.mean(
        jnp.abs(num_walks * wtm.shape[0] * loss_on_target + loss_opposite))
    norms = jnp.mean(jnp.abs(left_factors)) + jnp.mean(jnp.abs(right_factors))
    loss_on_reg = beta * jnp.sum(attention ** 2)
    return loss_on_matrices + loss_on_reg + gamma * norms


if __name__ == "__main__":
    key = jax.random.PRNGKey(0)
    k_attn, k_left, k_right, k_wtt, k_adj = jax.random.split(key, 5)

    # Parameters (uniform(-0.01, 0.01), as in initialize_weights).
    attention = jax.random.uniform(k_attn, (WINDOW, 1),
                                   minval=-0.01, maxval=0.01, dtype=jnp.float32)
    left_factors = jax.random.uniform(k_left, (N_NODES, HALF_DIM),
                                      minval=-0.01, maxval=0.01, dtype=jnp.float32)
    right_factors = jax.random.uniform(k_right, (HALF_DIM, N_NODES),
                                       minval=-0.01, maxval=0.01, dtype=jnp.float32)

    # Forward inputs.
    weighted_target_tensor = jax.random.uniform(
        k_wtt, (WINDOW, N_NODES, N_NODES), dtype=jnp.float32)
    adjacency_opposite = (jax.random.uniform(k_adj, (N_NODES, N_NODES)) > 0.5
                          ).astype(jnp.float32)

    loss = attention_walk_forward(weighted_target_tensor, adjacency_opposite,
                                  left_factors, right_factors, attention)
    loss = jax.block_until_ready(loss)

    ref = attention_walk_reference(weighted_target_tensor, adjacency_opposite,
                                   left_factors, right_factors, attention)
    ref = jax.block_until_ready(ref)

    if not jnp.allclose(loss, ref, rtol=2e-4, atol=1e-2):
        raise AssertionError(f"mismatch: kernel={loss} ref={ref}")

    print("KERNEL_OK")
</pallas_src>

<mosaic_0001>
module attributes {stable_mosaic.version = 11 : i64} {
  func.func @_attention_walk_kernel(%arg0: i32, %arg1: memref<5xf32, #tpu.memory_space<smem>>, %arg2: memref<5x128x256xf32, #tpu.memory_space<vmem>>, %arg3: memref<128x256xbf16, #tpu.memory_space<vmem>>, %arg4: memref<128x64xf32, #tpu.memory_space<vmem>>, %arg5: memref<64x256xf32, #tpu.memory_space<vmem>>, %arg6: memref<1x8x128xf32, #tpu.memory_space<vmem>>) attributes {dimension_semantics = [#tpu.dimension_semantics<parallel>], iteration_bounds = array<i64: 2>, scalar_prefetch = 0 : i64, scratch_operands = 0 : i64, tpu.core_type = #tpu.core_type<tc>, window_params = [{transform_indices = @transform_0, window_bounds = array<i64: 5>}, {transform_indices = @transform_1, window_bounds = array<i64: 5, 128, 256>}, {transform_indices = @transform_2, window_bounds = array<i64: 128, 256>}, {transform_indices = @transform_3, window_bounds = array<i64: 128, 64>}, {pipeline_mode = #tpu.pipeline_mode<synchronous>, transform_indices = @transform_4, window_bounds = array<i64: 64, 256>}, {transform_indices = @transform_5, window_bounds = array<i64: 1, 8, 128>}]} {
    %c0 = arith.constant 0 : index
    %0 = memref.load %arg1[%c0] : memref<5xf32, #tpu.memory_space<smem>>
    %c0_0 = arith.constant 0 : index
    %c0_1 = arith.constant 0 : index
    %c0_2 = arith.constant 0 : index
    %1 = vector.load %arg2[%c0_0, %c0_1, %c0_2] : memref<5x128x256xf32, #tpu.memory_space<vmem>>, vector<1x128x256xf32>
    %2 = vector.shape_cast %1 : vector<1x128x256xf32> to vector<128x256xf32>
    %3 = vector.broadcast %0 : f32 to vector<128x256xf32>
    %4 = arith.mulf %3, %2 : vector<128x256xf32>
    %c1 = arith.constant 1 : index
    %5 = memref.load %arg1[%c1] : memref<5xf32, #tpu.memory_space<smem>>
    %c1_3 = arith.constant 1 : index
    %c0_4 = arith.constant 0 : index
    %c0_5 = arith.constant 0 : index
    %6 = vector.load %arg2[%c1_3, %c0_4, %c0_5] : memref<5x128x256xf32, #tpu.memory_space<vmem>>, vector<1x128x256xf32>
    %7 = vector.shape_cast %6 : vector<1x128x256xf32> to vector<128x256xf32>
    %8 = vector.broadcast %5 : f32 to vector<128x256xf32>
    %9 = arith.mulf %8, %7 : vector<128x256xf32>
    %10 = arith.addf %4, %9 : vector<128x256xf32>
    %c2 = arith.constant 2 : index
    %11 = memref.load %arg1[%c2] : memref<5xf32, #tpu.memory_space<smem>>
    %c2_6 = arith.constant 2 : index
    %c0_7 = arith.constant 0 : index
    %c0_8 = arith.constant 0 : index
    %12 = vector.load %arg2[%c2_6, %c0_7, %c0_8] : memref<5x128x256xf32, #tpu.memory_space<vmem>>, vector<1x128x256xf32>
    %13 = vector.shape_cast %12 : vector<1x128x256xf32> to vector<128x256xf32>
    %14 = vector.broadcast %11 : f32 to vector<128x256xf32>
    %15 = arith.mulf %14, %13 : vector<128x256xf32>
    %16 = arith.addf %10, %15 : vector<128x256xf32>
    %c3 = arith.constant 3 : index
    %17 = memref.load %arg1[%c3] : memref<5xf32, #tpu.memory_space<smem>>
    %c3_9 = arith.constant 3 : index
    %c0_10 = arith.constant 0 : index
    %c0_11 = arith.constant 0 : index
    %18 = vector.load %arg2[%c3_9, %c0_10, %c0_11] : memref<5x128x256xf32, #tpu.memory_space<vmem>>, vector<1x128x256xf32>
    %19 = vector.shape_cast %18 : vector<1x128x256xf32> to vector<128x256xf32>
    %20 = vector.broadcast %17 : f32 to vector<128x256xf32>
    %21 = arith.mulf %20, %19 : vector<128x256xf32>
    %22 = arith.addf %16, %21 : vector<128x256xf32>
    %c4 = arith.constant 4 : index
    %23 = memref.load %arg1[%c4] : memref<5xf32, #tpu.memory_space<smem>>
    %c4_12 = arith.constant 4 : index
    %c0_13 = arith.constant 0 : index
    %c0_14 = arith.constant 0 : index
    %24 = vector.load %arg2[%c4_12, %c0_13, %c0_14] : memref<5x128x256xf32, #tpu.memory_space<vmem>>, vector<1x128x256xf32>
    %25 = vector.shape_cast %24 : vector<1x128x256xf32> to vector<128x256xf32>
    %26 = vector.broadcast %23 : f32 to vector<128x256xf32>
    %27 = arith.mulf %26, %25 : vector<128x256xf32>
    %28 = arith.addf %22, %27 : vector<128x256xf32>
    %c0_15 = arith.constant 0 : index
    %c0_16 = arith.constant 0 : index
    %29 = vector.load %arg4[%c0_15, %c0_16] : memref<128x64xf32, #tpu.memory_space<vmem>>, vector<128x64xf32>
    %c0_17 = arith.constant 0 : index
    %c0_18 = arith.constant 0 : index
    %30 = vector.load %arg5[%c0_17, %c0_18] : memref<64x256xf32, #tpu.memory_space<vmem>>, vector<64x256xf32>
    %cst = arith.constant dense<0.000000e+00> : vector<128x256xf32>
    %31 = tpu.matmul %29, %30, %cst {dimension_numbers = #tpu.dot_dimension_numbers<[1], [0], [0], [1], [0, 0, 1, 1], [], []>} : vector<128x64xf32>, vector<64x256xf32>, vector<128x256xf32> -> vector<128x256xf32>
    %cst_19 = arith.constant 0.000000e+00 : f32
    %32 = vector.broadcast %cst_19 : f32 to vector<128x256xf32>
    %33 = arith.subf %32, %31 : vector<128x256xf32>
    %cst_20 = arith.constant 0.000000e+00 : f32
    %34 = vector.broadcast %cst_20 : f32 to vector<128x256xf32>
    %35 = arith.maximumf %33, %34 : vector<128x256xf32>
    %36 = math.absf %31 : vector<128x256xf32>
    %cst_21 = arith.constant 0.000000e+00 : f32
    %37 = vector.broadcast %cst_21 : f32 to vector<128x256xf32>
    %38 = arith.subf %37, %36 : vector<128x256xf32>
    %39 = math.exp %38 : vector<128x256xf32>
    %cst_22 = arith.constant 1.000000e+00 : f32
    %40 = vector.broadcast %cst_22 : f32 to vector<128x256xf32>
    %41 = arith.addf %40, %39 : vector<128x256xf32>
    %42 = math.log %41 : vector<128x256xf32>
    %43 = arith.addf %35, %42 : vector<128x256xf32>
    %c0_23 = arith.constant 0 : index
    %c0_24 = arith.constant 0 : index
    %44 = vector.load %arg3[%c0_23, %c0_24] : memref<128x256xbf16, #tpu.memory_space<vmem>>, vector<128x256xbf16>
    %45 = arith.extf %44 : vector<128x256xbf16> to vector<128x256xf32>
    %46 = arith.mulf %28, %43 : vector<128x256xf32>
    %47 = arith.addf %31, %43 : vector<128x256xf32>
    %48 = arith.mulf %45, %47 : vector<128x256xf32>
    %49 = arith.addf %46, %48 : vector<128x256xf32>
    %50 = math.absf %49 : vector<128x256xf32>
    %51 = vector.shape_cast %50 : vector<128x256xf32> to vector<1x128x256xf32>
    %cst_25 = arith.constant dense<0.000000e+00> : vector<1xf32>
    %52 = vector.multi_reduction <add>, %51, %cst_25 [1, 2] : vector<1x128x256xf32> to vector<1xf32>
    %53 = vector.shape_cast %52 : vector<1xf32> to vector<1x1x1xf32>
    %54 = vector.extract %53[0, 0, 0] : f32 from vector<1x1x1xf32>
    %55 = vector.broadcast %54 : f32 to vector<1x8x128xf32>
    %c0_26 = arith.constant 0 : index
    %c0_27 = arith.constant 0 : index
    %c0_28 = arith.constant 0 : index
    %56 = vector.load %arg6[%c0_26, %c0_27, %c0_28] : memref<1x8x128xf32, #tpu.memory_space<vmem>>, vector<1x8x128xf32>
    tpu.vector_store %arg6[%c0_26, %c0_27, %c0_28], %55 {strides = array<i32>} : memref<1x8x128xf32, #tpu.memory_space<vmem>>, vector<1x8x128xf32>,
    return
  }
  func.func @transform_0(%arg0: i32) -> i32 {
    %c0_i32 = arith.constant 0 : i32
    %c0_i32_0 = arith.constant 0 : i32
    return %c0_i32 : i32
  }
  func.func @transform_1(%arg0: i32) -> (i32, i32, i32) {
    %c0_i32 = arith.constant 0 : i32
    %c0_i32_0 = arith.constant 0 : i32
    %c0_i32_1 = arith.constant 0 : i32
    return %c0_i32, %arg0, %c0_i32_0 : i32, i32, i32
  }
  func.func @transform_2(%arg0: i32) -> (i32, i32) {
    %c0_i32 = arith.constant 0 : i32
    %c0_i32_0 = arith.constant 0 : i32
    return %arg0, %c0_i32 : i32, i32
  }
  func.func @transform_3(%arg0: i32) -> (i32, i32) {
    %c0_i32 = arith.constant 0 : i32
    %c0_i32_0 = arith.constant 0 : i32
    return %arg0, %c0_i32 : i32, i32
  }
  func.func @transform_4(%arg0: i32) -> (i32, i32) {
    %c0_i32 = arith.constant 0 : i32
    %c0_i32_0 = arith.constant 0 : i32
    %c0_i32_1 = arith.constant 0 : i32
    return %c0_i32, %c0_i32_0 : i32, i32
  }
  func.func @transform_5(%arg0: i32) -> (i32, i32, i32) {
    %c0_i32 = arith.constant 0 : i32
    %c0_i32_0 = arith.constant 0 : i32
    %c0_i32_1 = arith.constant 0 : i32
    return %arg0, %c0_i32, %c0_i32_0 : i32, i32, i32
  }
}

</mosaic_0001>

<llo_original>
// kernel: tpu_custom_call.1
$region0: #{tpu_custom_call.1}
  #allocation0 [shape = 'u32[]', space=smem, size = 0x4, offset = 0x4, fixed_abs, tag = 'smem constant byte address 0x4 - core index']
  #allocation1 [shape = 'u32[72,128]{1,0:T(1,128)}', space=vmem, size = 0x9000, scoped, tag = 'internal scratch']
  #allocation11 [shape = 's32[]', space=sflag, size = 0x4, offset = 0, fixed_abs, tag = 'sflag constant byte address 0x0 - dummy sync flag']
  %s0 = inlined_call_operand.hbm [shape: f32[5], index: 0, kind: input, shape index: {}]
  %s1 = inlined_call_operand.hbm [shape: f32[5,256,256], index: 1, kind: input, shape index: {}]
  %s2 = inlined_call_operand.hbm [shape: bf16[256,256], index: 2, kind: input, shape index: {}]
  %s3 = inlined_call_operand.vmem [shape: f32[256,64], index: 3, kind: input, shape index: {}]
  %s4 = inlined_call_operand.hbm [shape: f32[64,256], index: 4, kind: input, shape index: {}]
  %s5 = inlined_call_operand.hbm [shape: f32[2,8,128], index: 5, kind: output, shape index: {}]
  %s6 = sld [smem:[#allocation0]]
  $region69: #{tpu_custom_call.1} parent=0
    _
  %s8 = ssub.s32 1, %s6
  %s9 = scalar_select 0, %s8, %s6
  $region1: #{tpu_custom_call.1} parent=0
    #allocation2 [shape = 'u8[512]{0}', space=smem, size = 0x200, scoped, tag = 'input window, operand 0, single buffered']
    #allocation3 [shape = 's32[2]{0}', space=sflag, size = 0x8, scoped, tag = 'scoped memory for tpu_custom_call.1']
    #allocation4 [shape = 's32[2]{0}', space=sflag, size = 0x8, scoped, tag = 'scoped memory for tpu_custom_call.1']
    #allocation5 [shape = 's32[2]{0}', space=sflag, size = 0x8, scoped, tag = 'scoped memory for tpu_custom_call.1']
    #allocation6 [shape = 'u8[1310720]{0}', space=vmem, size = 0x140000, scoped, tag = 'input window, operand 1']
    #allocation7 [shape = 'u8[131072]{0}', space=vmem, size = 0x20000, scoped, tag = 'input window, operand 2']
    #allocation8 [shape = 's32[2]{0}', space=sflag, size = 0x8, scoped, tag = 'scoped memory for tpu_custom_call.1']
    #allocation9 [shape = 'u8[65536]{0}', space=vmem, size = 0x10000, scoped, tag = 'input window, operand 4, single buffered']
    #allocation10 [shape = 'u8[8192]{0}', space=vmem, size = 0x2000, scoped, tag = 'output window, operand 0']
    %10 = vsyncpa [#allocation5], 0
    %11 = vsyncpa [#allocation3], 0
    %s12 = scalar_lea.sflag [#allocation3], 1
    %13 = vsyncpa %s12, 0
    %14 = vsyncpa [#allocation8], 0
    %s15 = scalar_lea.sflag [#allocation8], 1
    %16 = vsyncpa %s15, 0
    %17 = vsyncpa [#allocation4], 0
    %s18 = scalar_lea.sflag [#allocation4], 1
    %19 = vsyncpa %s18, 0
    loop: start=0, step=1, limit=4
    $region2: #{tpu_custom_call.1} parent=1 // loop_pre_header
      _
    $region3: #{tpu_custom_call.1} parent=1 // loop_header
      %s21 = sphi 0, %s25
      %p22 = scmp.ge.s32.totalorder %s21, 4
      %s29 = sphi 0, %s29
      %s31 = sphi 0, %s29
      %s32 = sphi 0, %s31
      %s46 = sphi 0, %s32
      %s52 = sphi 0, %s54
      %s55 = sphi 0, %s52
      %s56 = sphi 0, %s55
      %s72 = sphi 0, %s56
      %s78 = sphi 0, %s80
      %s81 = sphi 0, %s78
      %s82 = sphi 0, %s81
      %s98 = sphi 0, %s82
      %s104 = sphi 0, %s106
      %s107 = sphi 0, %s104
      %s108 = sphi 0, %s107
      %s124 = sphi 0, %s108
      %s128 = sphi 0, %s128
      %s130 = sphi 0, %s128
      %s131 = sphi 0, %s130
      %s145 = sphi 0, %s131
      %s151 = sphi 0, %s153
      %s154 = sphi 0, %s151
      %s155 = sphi 0, %s154
      %s171 = sphi 0, %s155
    $region4: #{tpu_custom_call.1} parent=1 // loop_header_branch
      %24 = sbr.rel (%p22) target = $region8
    $region5: #{tpu_custom_call.1} parent=1 // loop_body
      %s26 = ssub.s32 %s21, 1
      %s27 = ssub.s32 %s21, 2
      %s28 = sadd.s32 %s21, 1
      %s30 = sadd.s32 %s29, 1
      %p33 = scmp.eq.s32.totalorder %s21, 1
      %p34 = scmp.ne.s32.totalorder %s29, %s31
      %p35 = scmp.eq.s32.totalorder %s21, 0
      %p36 = por %p34, %p35
      %p37 = scmp.ne.s32.totalorder %s29, %s31
      %p38 = scmp.eq.s32.totalorder %s26, 1
      %p39 = por %p37, %p38
      %p40 = scmp.ne.s32.totalorder %s31, %s32
      %p41 = scmp.eq.s32.totalorder %s26, 0
      %p42 = por %p40, %p41
      %p43 = scmp.ne.s32.totalorder %s31, %s32
      %p44 = scmp.eq.s32.totalorder %s27, 1
      %p45 = por %p43, %p44
      %p47 = scmp.ne.s32.totalorder %s32, %s46
      %p48 = scmp.eq.s32.totalorder %s27, 0
      %p49 = por %p47, %p48
      %s50 = ssub.s32 %s21, %s28
      %p51 = scmp.eq.s32.totalorder %s50, 0
      %s53 = sadd.s32 %s52, 1
      %s54 = scalar_select %p51, %s52, %s53
      %p57 = pneg %p51
      %p58 = scmp.eq.s32.totalorder %s21, 1
      %p59 = por %p57, %p58
      %p60 = scmp.ne.s32.totalorder %s52, %s55
      %p61 = scmp.eq.s32.totalorder %s21, 0
      %p62 = por %p60, %p61
      %p63 = scmp.ne.s32.totalorder %s52, %s55
      %p64 = scmp.eq.s32.totalorder %s26, 1
      %p65 = por %p63, %p64
      %p66 = scmp.ne.s32.totalorder %s55, %s56
      %p67 = scmp.eq.s32.totalorder %s26, 0
      %p68 = por %p66, %p67
      %p69 = scmp.ne.s32.totalorder %s55, %s56
      %p70 = scmp.eq.s32.totalorder %s27, 1
      %p71 = por %p69, %p70
      %p73 = scmp.ne.s32.totalorder %s56, %s72
      %p74 = scmp.eq.s32.totalorder %s27, 0
      %p75 = por %p73, %p74
      %s76 = ssub.s32 %s21, %s28
      %p77 = scmp.eq.s32.totalorder %s76, 0
      %s79 = sadd.s32 %s78, 1
      %s80 = scalar_select %p77, %s78, %s79
      %p83 = pneg %p77
      %p84 = scmp.eq.s32.totalorder %s21, 1
      %p85 = por %p83, %p84
      %p86 = scmp.ne.s32.totalorder %s78, %s81
      %p87 = scmp.eq.s32.totalorder %s21, 0
      %p88 = por %p86, %p87
      %p89 = scmp.ne.s32.totalorder %s78, %s81
      %p90 = scmp.eq.s32.totalorder %s26, 1
      %p91 = por %p89, %p90
      %p92 = scmp.ne.s32.totalorder %s81, %s82
      %p93 = scmp.eq.s32.totalorder %s26, 0
      %p94 = por %p92, %p93
      %p95 = scmp.ne.s32.totalorder %s81, %s82
      %p96 = scmp.eq.s32.totalorder %s27, 1
      %p97 = por %p95, %p96
      %p99 = scmp.ne.s32.totalorder %s82, %s98
      %p100 = scmp.eq.s32.totalorder %s27, 0
      %p101 = por %p99, %p100
      %s102 = ssub.s32 %s21, %s28
      %p103 = scmp.eq.s32.totalorder %s102, 0
      %s105 = sadd.s32 %s104, 1
      %s106 = scalar_select %p103, %s104, %s105
      %p109 = pneg %p103
      %p110 = scmp.eq.s32.totalorder %s21, 1
      %p111 = por %p109, %p110
      %p112 = scmp.ne.s32.totalorder %s104, %s107
      %p113 = scmp.eq.s32.totalorder %s21, 0
      %p114 = por %p112, %p113
      %p115 = scmp.ne.s32.totalorder %s104, %s107
      %p116 = scmp.eq.s32.totalorder %s26, 1
      %p117 = por %p115, %p116
      %p118 = scmp.ne.s32.totalorder %s107, %s108
      %p119 = scmp.eq.s32.totalorder %s26, 0
      %p120 = por %p118, %p119
      %p121 = scmp.ne.s32.totalorder %s107, %s108
      %p122 = scmp.eq.s32.totalorder %s27, 1
      %p123 = por %p121, %p122
      %p125 = scmp.ne.s32.totalorder %s108, %s124
      %p126 = scmp.eq.s32.totalorder %s27, 0
      %p127 = por %p125, %p126
      %s129 = sadd.s32 %s128, 1
      %p132 = scmp.eq.s32.totalorder %s21, 1
      %p133 = scmp.ne.s32.totalorder %s128, %s130
      %p134 = scmp.eq.s32.totalorder %s21, 0
      %p135 = por %p133, %p134
      %p136 = scmp.ne.s32.totalorder %s128, %s130
      %p137 = scmp.eq.s32.totalorder %s26, 1
      %p138 = por %p136, %p137
      %p139 = scmp.ne.s32.totalorder %s130, %s131
      %p140 = scmp.eq.s32.totalorder %s26, 0
      %p141 = por %p139, %p140
      %p142 = scmp.ne.s32.totalorder %s130, %s131
      %p143 = scmp.eq.s32.totalorder %s27, 1
      %p144 = por %p142, %p143
      %p146 = scmp.ne.s32.totalorder %s131, %s145
      %p147 = scmp.eq.s32.totalorder %s27, 0
      %p148 = por %p146, %p147
      %s149 = ssub.s32 %s21, %s28
      %p150 = scmp.eq.s32.totalorder %s149, 0
      %s152 = sadd.s32 %s151, 1
      %s153 = scalar_select %p150, %s151, %s152
      %p156 = pneg %p150
      %p157 = scmp.eq.s32.totalorder %s21, 1
      %p158 = por %p156, %p157
      %p159 = scmp.ne.s32.totalorder %s151, %s154
      %p160 = scmp.eq.s32.totalorder %s21, 0
      %p161 = por %p159, %p160
      %p162 = scmp.ne.s32.totalorder %s151, %s154
      %p163 = scmp.eq.s32.totalorder %s26, 1
      %p164 = por %p162, %p163
      %p165 = scmp.ne.s32.totalorder %s154, %s155
      %p166 = scmp.eq.s32.totalorder %s26, 0
      %p167 = por %p165, %p166
      %p168 = scmp.ne.s32.totalorder %s154, %s155
      %p169 = scmp.eq.s32.totalorder %s27, 1
      %p170 = por %p168, %p169
      %p172 = scmp.ne.s32.totalorder %s155, %s171
      %p173 = scmp.eq.s32.totalorder %s27, 0
      %p174 = por %p172, %p173
      %p175 = scmp.le.s32.totalorder 1, %s21
      %p176 = scmp.lt.s32.totalorder %s21, 3
      %p177 = pnand %p175, %p176
      %p178 = pneg %p177
      // Predicated region
      $region9: #{tpu_custom_call.1} parent=5 // pred_check
        _
      $region10: #{tpu_custom_call.1} parent=5 // pred_check_branch
        %180 = sbr.rel (%p177) target = $region12
      $region11: #{tpu_custom_call.1} parent=5 // pred_region
        %s181 = ssub.s32 %s21, 1
        // Predicated region
        $region13: #{tpu_custom_call.1} parent=11 // pred_check
          %p182 = pneg %p42
        $region14: #{tpu_custom_call.1} parent=11 // pred_check_branch
          %184 = sbr.rel (%p182) target = $region16
        $region15: #{tpu_custom_call.1} parent=11 // pred_region
          %186 = vsyncadd [#allocation5], 0
          %s188 = sshll.u32 %s0, 4
          %s189 = int_to_ptr.hbm [resolvable:$true] %s188
          %191 = dma.hbm_to_smem %s189, 16, [#allocation2], [#allocation5]
        $region16: #{tpu_custom_call.1} parent=11 // pred_fallthru
          _
        // Predicated region
        $region17: #{tpu_custom_call.1} parent=11 // pred_check
          %p192 = pneg %p141
        $region18: #{tpu_custom_call.1} parent=11 // pred_check_branch
          %194 = sbr.rel (%p192) target = $region20
        $region19: #{tpu_custom_call.1} parent=11 // pred_region
          %196 = vsyncadd [#allocation8], 0
          %s197 = sshll.u32 %s4, 4
          %s198 = int_to_ptr.hbm [resolvable:$true] %s197
          %s199 = sshll.u32 [#allocation9], 4
          %s200 = int_to_ptr.vmem [resolvable:$true] %s199
          %205 = dma.hbm_to_vmem [thread:$0]  %s198, 2048, %s200, [#allocation8], 256, 256, 16
        $region20: #{tpu_custom_call.1} parent=11 // pred_fallthru
          _
      $region12: #{tpu_custom_call.1} parent=5 // pred_fallthru
        _
      %p206 = scmp.lt.s32.totalorder %s21, 2
      // Predicated region
      $region21: #{tpu_custom_call.1} parent=5 // pred_check
        %p207 = pneg %p206
      $region22: #{tpu_custom_call.1} parent=5 // pred_check_branch
        %209 = sbr.rel (%p207) target = $region24
      $region23: #{tpu_custom_call.1} parent=5 // pred_region
        // Predicated region
        $region25: #{tpu_custom_call.1} parent=23 // pred_check
          %p210 = pneg %p62
        $region26: #{tpu_custom_call.1} parent=23 // pred_check_branch
          %212 = sbr.rel (%p210) target = $region28
        $region27: #{tpu_custom_call.1} parent=23 // pred_region
          #allocation12 [shape = 'u32[6]{0}', space=smem, size = 0x18, scoped, tag = 'DMA stride descriptor']
          %s213 = sand.u32 %s52, 1
          %s214 = scalar_lea.sflag [#allocation3], %s213
          %s215 = sand.u32 %s52, 1
          %s216 = smul.addr %s215, 1280
          %s217 = scalar_lea.vmem [#allocation6], %s216
          %s218 = smul.u32 16, %s21
          %220 = vsyncadd %s214, 0
          %s221 = smul.addr %s218, 2
          %s222 = smul.addr %s221, 8
          %s223 = scalar_lea.hbm %s1, %s222
          %s225 = sshll.u32 1, 14
          %s226 = sxor.u32 4294967295, %s225
          %s228 = sld [smem:[#allocation0]]
          %s229 = sadd.s32 2, %s228
          %s231 = sshll.u32 7, 26
          %s232 = sxor.u32 4294967295, %s231
          %s233 = sand.u32 0, %s232
          %s234 = sshll.u32 %s229, 26
          %s235 = sor.u32 %s233, %s234
          %s236 = sshll.u32 %s223, 4
          %s237 = int_to_ptr.hbm [resolvable:$true] %s236
          %s238 = sshll.u32 %s217, 4
          %s239 = int_to_ptr.vmem [resolvable:$true] %s238
          %245 = sst [smem:[#allocation12]] 8192
          %s246 = scalar_lea.smem [#allocation12], 1
          %247 = sst [smem:[%s246]] 4096
          %s248 = scalar_lea.smem [#allocation12], 2
          %249 = sst [smem:[%s248]] 16
          %s250 = scalar_lea.smem [#allocation12], 3
          %251 = sst [smem:[%s250]] 256
          %s252 = scalar_lea.smem [#allocation12], 4
          %253 = sst [smem:[%s252]] 256
          %s254 = scalar_lea.smem [#allocation12], 5
          %255 = sst [smem:[%s254]] 16
          %257 = dma.general %s237, 20480, %s239, %s214, [#allocation11], [#allocation12], %s235, 0
        $region28: #{tpu_custom_call.1} parent=23 // pred_fallthru
          _
        // Predicated region
        $region29: #{tpu_custom_call.1} parent=23 // pred_check
          %p258 = pneg %p88
        $region30: #{tpu_custom_call.1} parent=23 // pred_check_branch
          %260 = sbr.rel (%p258) target = $region32
        $region31: #{tpu_custom_call.1} parent=23 // pred_region
          %s261 = sand.u32 %s21, 1
          %s262 = scalar_lea.sflag [#allocation8], %s261
          %s263 = sand.u32 %s78, 1
          %s264 = smul.addr %s263, 128
          %s265 = scalar_lea.vmem [#allocation7], %s264
          %s266 = smul.u32 16, %s21
          %268 = vsyncadd %s262, 0
          %s269 = smul.addr %s266, 2
          %s270 = smul.addr %s269, 4
          %s271 = scalar_lea.hbm %s2, %s270
          %s272 = sshll.u32 %s271, 4
          %s273 = int_to_ptr.hbm [resolvable:$true] %s272
          %s274 = sshll.u32 %s265, 4
          %s275 = int_to_ptr.vmem [resolvable:$true] %s274
          %280 = dma.hbm_to_vmem [thread:$0]  %s273, 2048, %s275, %s262, 128, 128, 8
        $region32: #{tpu_custom_call.1} parent=23 // pred_fallthru
          _
        // Predicated region
        $region33: #{tpu_custom_call.1} parent=23 // pred_check
          %p281 = pneg %p114
        $region34: #{tpu_custom_call.1} parent=23 // pred_check_branch
          %283 = sbr.rel (%p281) target = $region36
        $region35: #{tpu_custom_call.1} parent=23 // pred_region
          %s284 = smul.u32 16, %s21
          %p285 = scmp.lt.s32.totalorder %s284, 31
          %s286 = scalar_select %p285, %s284, 31
          %s287 = smul.addr %s286, 8
          %s288 = scalar_lea.vmem %s3, %s287
          %s289 = smul.u32 16, %s21
        $region36: #{tpu_custom_call.1} parent=23 // pred_fallthru
          _
      $region24: #{tpu_custom_call.1} parent=5 // pred_fallthru
        _
      %p290 = scmp.le.s32.totalorder 1, %s21
      %p291 = scmp.lt.s32.totalorder %s21, 3
      %p292 = pnand %p290, %p291
      %p293 = pneg %p292
      // Predicated region
      $region37: #{tpu_custom_call.1} parent=5 // pred_check
        _
      $region38: #{tpu_custom_call.1} parent=5 // pred_check_branch
        %295 = sbr.rel (%p292) target = $region40
      $region39: #{tpu_custom_call.1} parent=5 // pred_region
        %s296 = ssub.s32 %s21, 1
        // Predicated region
        $region41: #{tpu_custom_call.1} parent=39 // pred_check
          %p297 = pneg %p42
        $region42: #{tpu_custom_call.1} parent=39 // pred_check_branch
          %299 = sbr.rel (%p297) target = $region44
        $region43: #{tpu_custom_call.1} parent=39 // pred_region
          %301 = dma.done [#allocation5], 16
        $region44: #{tpu_custom_call.1} parent=39 // pred_fallthru
          _
        %s302 = sand.u32 %s55, 1
        %s303 = scalar_lea.sflag [#allocation3], %s302
        %s304 = sand.u32 %s55, 1
        %s305 = smul.addr %s304, 1280
        %s306 = scalar_lea.vmem [#allocation6], %s305
        // Predicated region
        $region45: #{tpu_custom_call.1} parent=39 // pred_check
          %p307 = pneg %p68
        $region46: #{tpu_custom_call.1} parent=39 // pred_check_branch
          %309 = sbr.rel (%p307) target = $region48
        $region47: #{tpu_custom_call.1} parent=39 // pred_region
          %311 = dma.done %s303, 20480
        $region48: #{tpu_custom_call.1} parent=39 // pred_fallthru
          _
        %s312 = sand.u32 %s26, 1
        %s313 = scalar_lea.sflag [#allocation8], %s312
        %s314 = sand.u32 %s81, 1
        %s315 = smul.addr %s314, 128
        %s316 = scalar_lea.vmem [#allocation7], %s315
        // Predicated region
        $region49: #{tpu_custom_call.1} parent=39 // pred_check
          %p317 = pneg %p94
        $region50: #{tpu_custom_call.1} parent=39 // pred_check_branch
          %319 = sbr.rel (%p317) target = $region52
        $region51: #{tpu_custom_call.1} parent=39 // pred_region
          %321 = dma.done %s313, 2048
        $region52: #{tpu_custom_call.1} parent=39 // pred_fallthru
          _
        // Predicated region
        $region53: #{tpu_custom_call.1} parent=39 // pred_check
          %p322 = pneg %p141
        $region54: #{tpu_custom_call.1} parent=39 // pred_check_branch
          %324 = sbr.rel (%p322) target = $region56
        $region55: #{tpu_custom_call.1} parent=39 // pred_region
          %326 = dma.done [#allocation8], 2048
        $region56: #{tpu_custom_call.1} parent=39 // pred_fallthru
          _
        %327 = sfence
        %p328 = pneg %p42
        %p329 = pneg %p39
        %s330 = sand.u32 %s55, 1
        %s331 = scalar_lea.sflag [#allocation3], %s330
        %s332 = sand.u32 %s55, 1
        %s333 = smul.addr %s332, 1280
        %s334 = scalar_lea.vmem [#allocation6], %s333
        %p335 = pneg %p68
        %p336 = pneg %p65
        %s337 = sand.u32 %s26, 1
        %s338 = scalar_lea.sflag [#allocation8], %s337
        %s339 = sand.u32 %s81, 1
        %s340 = smul.addr %s339, 128
        %s341 = scalar_lea.vmem [#allocation7], %s340
        %p342 = pneg %p94
        %p343 = pneg %p91
        %s344 = smul.u32 16, %s26
        %p345 = scmp.lt.s32.totalorder %s344, 31
        %s346 = scalar_select %p345, %s344, 31
        %s347 = smul.addr %s346, 8
        %s348 = scalar_lea.vmem %s3, %s347
        %p349 = pneg %p120
        %p350 = pneg %p117
        %p351 = pneg %p141
        %p352 = pneg %p138
        %p353 = pneg %p167
        %p354 = pneg %p164
        %s355 = sand.u32 %s154, 1
        %s356 = scalar_lea.sflag [#allocation4], %s355
        %s357 = sand.u32 %s154, 1
        %s358 = smul.addr %s357, 8
        %s359 = scalar_lea.vmem [#allocation10], %s358
        %s360 = smul.u32 16, %s26
        %s361 = smul.u32 16, %s26
        %s362 = smul.u32 16, %s26
        %p363 = scmp.lt.s32.totalorder %s362, 31
        %s364 = scalar_select %p363, %s362, 31
        %s365 = smul.addr %s364, 8
        %s366 = scalar_lea.vmem %s3, %s365
        %s367 = smul.u32 16, %s26
        %s368 = sld [smem:[#allocation2]]
        %v369 = vld [vmem:[%s306] sm:$0xff]
        %v370 = vld [vmem:[%s306 + $0x8] sm:$0xff]
        %v371 = vld [vmem:[%s306 + $0x10] sm:$0xff]
        %v372 = vld [vmem:[%s306 + $0x18] sm:$0xff]
        %v373 = vld [vmem:[%s306 + $0x20] sm:$0xff]
        %v374 = vld [vmem:[%s306 + $0x28] sm:$0xff]
        %v375 = vld [vmem:[%s306 + $0x30] sm:$0xff]
        %v376 = vld [vmem:[%s306 + $0x38] sm:$0xff]
        %v377 = vld [vmem:[%s306 + $0x40] sm:$0xff]
        %v378 = vld [vmem:[%s306 + $0x48] sm:$0xff]
        %v379 = vld [vmem:[%s306 + $0x50] sm:$0xff]
        %v380 = vld [vmem:[%s306 + $0x58] sm:$0xff]
        %v381 = vld [vmem:[%s306 + $0x60] sm:$0xff]
        %v382 = vld [vmem:[%s306 + $0x68] sm:$0xff]
        %v383 = vld [vmem:[%s306 + $0x70] sm:$0xff]
        %v384 = vld [vmem:[%s306 + $0x78] sm:$0xff]
        %v385 = vld [vmem:[%s306 + $0x80] sm:$0xff]
        %v386 = vld [vmem:[%s306 + $0x88] sm:$0xff]
        %v387 = vld [vmem:[%s306 + $0x90] sm:$0xff]
        %v388 = vld [vmem:[%s306 + $0x98] sm:$0xff]
        %v389 = vld [vmem:[%s306 + $0xa0] sm:$0xff]
        %v390 = vld [vmem:[%s306 + $0xa8] sm:$0xff]
        %v391 = vld [vmem:[%s306 + $0xb0] sm:$0xff]
        %v392 = vld [vmem:[%s306 + $0xb8] sm:$0xff]
        %v393 = vld [vmem:[%s306 + $0xc0] sm:$0xff]
        %v394 = vld [vmem:[%s306 + $0xc8] sm:$0xff]
        %v395 = vld [vmem:[%s306 + $0xd0] sm:$0xff]
        %v396 = vld [vmem:[%s306 + $0xd8] sm:$0xff]
        %v397 = vld [vmem:[%s306 + $0xe0] sm:$0xff]
        %v398 = vld [vmem:[%s306 + $0xe8] sm:$0xff]
        %v399 = vld [vmem:[%s306 + $0xf0] sm:$0xff]
        %v400 = vld [vmem:[%s306 + $0xf8] sm:$0xff]
        %v401 = vstv %s368
        %v402 = vmul.f32 %v401, %v369
        %v403 = vmul.f32 %v401, %v370
        %v404 = vmul.f32 %v401, %v371
        %v405 = vmul.f32 %v401, %v372
        %v406 = vmul.f32 %v401, %v373
        %v407 = vmul.f32 %v401, %v374
        %v408 = vmul.f32 %v401, %v375
        %v409 = vmul.f32 %v401, %v376
        %v410 = vmul.f32 %v401, %v377
        %v411 = vmul.f32 %v401, %v378
        %v412 = vmul.f32 %v401, %v379
        %v413 = vmul.f32 %v401, %v380
        %v414 = vmul.f32 %v401, %v381
        %v415 = vmul.f32 %v401, %v382
        %v416 = vmul.f32 %v401, %v383
        %v417 = vmul.f32 %v401, %v384
        %v418 = vmul.f32 %v401, %v385
        %v419 = vmul.f32 %v401, %v386
        %v420 = vmul.f32 %v401, %v387
        %v421 = vmul.f32 %v401, %v388
        %v422 = vmul.f32 %v401, %v389
        %v423 = vmul.f32 %v401, %v390
        %v424 = vmul.f32 %v401, %v391
        %v425 = vmul.f32 %v401, %v392
        %v426 = vmul.f32 %v401, %v393
        %v427 = vmul.f32 %v401, %v394
        %v428 = vmul.f32 %v401, %v395
        %v429 = vmul.f32 %v401, %v396
        %v430 = vmul.f32 %v401, %v397
        %v431 = vmul.f32 %v401, %v398
        %v432 = vmul.f32 %v401, %v399
        %v433 = vmul.f32 %v401, %v400
        %s434 = sld [smem:[#allocation2 + $0x1]]
        %s435 = scalar_lea.vmem %s306, 256 [#allocation6]
        %v436 = vld [vmem:[%s435] sm:$0xff]
        %v437 = vld [vmem:[%s435 + $0x8] sm:$0xff]
        %v438 = vld [vmem:[%s435 + $0x10] sm:$0xff]
        %v439 = vld [vmem:[%s435 + $0x18] sm:$0xff]
        %v440 = vld [vmem:[%s435 + $0x20] sm:$0xff]
        %v441 = vld [vmem:[%s435 + $0x28] sm:$0xff]
        %v442 = vld [vmem:[%s435 + $0x30] sm:$0xff]
        %v443 = vld [vmem:[%s435 + $0x38] sm:$0xff]
        %v444 = vld [vmem:[%s435 + $0x40] sm:$0xff]
        %v445 = vld [vmem:[%s435 + $0x48] sm:$0xff]
        %v446 = vld [vmem:[%s435 + $0x50] sm:$0xff]
        %v447 = vld [vmem:[%s435 + $0x58] sm:$0xff]
        %v448 = vld [vmem:[%s435 + $0x60] sm:$0xff]
        %v449 = vld [vmem:[%s435 + $0x68] sm:$0xff]
        %v450 = vld [vmem:[%s435 + $0x70] sm:$0xff]
        %v451 = vld [vmem:[%s435 + $0x78] sm:$0xff]
        %v452 = vld [vmem:[%s435 + $0x80] sm:$0xff]
        %v453 = vld [vmem:[%s435 + $0x88] sm:$0xff]
        %v454 = vld [vmem:[%s435 + $0x90] sm:$0xff]
        %v455 = vld [vmem:[%s435 + $0x98] sm:$0xff]
        %v456 = vld [vmem:[%s435 + $0xa0] sm:$0xff]
        %v457 = vld [vmem:[%s435 + $0xa8] sm:$0xff]
        %v458 = vld [vmem:[%s435 + $0xb0] sm:$0xff]
        %v459 = vld [vmem:[%s435 + $0xb8] sm:$0xff]
        %v460 = vld [vmem:[%s435 + $0xc0] sm:$0xff]
        %v461 = vld [vmem:[%s435 + $0xc8] sm:$0xff]
        %v462 = vld [vmem:[%s435 + $0xd0] sm:$0xff]
        %v463 = vld [vmem:[%s435 + $0xd8] sm:$0xff]
        %v464 = vld [vmem:[%s435 + $0xe0] sm:$0xff]
        %v465 = vld [vmem:[%s435 + $0xe8] sm:$0xff]
        %v466 = vld [vmem:[%s435 + $0xf0] sm:$0xff]
        %v467 = vld [vmem:[%s435 + $0xf8] sm:$0xff]
        %v468 = vstv %s434
        %v469 = vmul.f32 %v468, %v436
        %v470 = vmul.f32 %v468, %v437
        %v471 = vmul.f32 %v468, %v438
        %v472 = vmul.f32 %v468, %v439
        %v473 = vmul.f32 %v468, %v440
        %v474 = vmul.f32 %v468, %v441
        %v475 = vmul.f32 %v468, %v442
        %v476 = vmul.f32 %v468, %v443
        %v477 = vmul.f32 %v468, %v444
        %v478 = vmul.f32 %v468, %v445
        %v479 = vmul.f32 %v468, %v446
        %v480 = vmul.f32 %v468, %v447
        %v481 = vmul.f32 %v468, %v448
        %v482 = vmul.f32 %v468, %v449
        %v483 = vmul.f32 %v468, %v450
        %v484 = vmul.f32 %v468, %v451
        %v485 = vmul.f32 %v468, %v452
        %v486 = vmul.f32 %v468, %v453
        %v487 = vmul.f32 %v468, %v454
        %v488 = vmul.f32 %v468, %v455
        %v489 = vmul.f32 %v468, %v456
        %v490 = vmul.f32 %v468, %v457
        %v491 = vmul.f32 %v468, %v458
        %v492 = vmul.f32 %v468, %v459
        %v493 = vmul.f32 %v468, %v460
        %v494 = vmul.f32 %v468, %v461
        %v495 = vmul.f32 %v468, %v462
        %v496 = vmul.f32 %v468, %v463
        %v497 = vmul.f32 %v468, %v464
        %v498 = vmul.f32 %v468, %v465
        %v499 = vmul.f32 %v468, %v466
        %v500 = vmul.f32 %v468, %v467
        %v501 = vadd.f32 %v402, %v469
        %v502 = vadd.f32 %v403, %v470
        %v503 = vadd.f32 %v404, %v471
        %v504 = vadd.f32 %v405, %v472
        %v505 = vadd.f32 %v406, %v473
        %v506 = vadd.f32 %v407, %v474
        %v507 = vadd.f32 %v408, %v475
        %v508 = vadd.f32 %v409, %v476
        %v509 = vadd.f32 %v410, %v477
        %v510 = vadd.f32 %v411, %v478
        %v511 = vadd.f32 %v412, %v479
        %v512 = vadd.f32 %v413, %v480
        %v513 = vadd.f32 %v414, %v481
        %v514 = vadd.f32 %v415, %v482
        %v515 = vadd.f32 %v416, %v483
        %v516 = vadd.f32 %v417, %v484
        %v517 = vadd.f32 %v418, %v485
        %v518 = vadd.f32 %v419, %v486
        %v519 = vadd.f32 %v420, %v487
        %v520 = vadd.f32 %v421, %v488
        %v521 = vadd.f32 %v422, %v489
        %v522 = vadd.f32 %v423, %v490
        %v523 = vadd.f32 %v424, %v491
        %v524 = vadd.f32 %v425, %v492
        %v525 = vadd.f32 %v426, %v493
        %v526 = vadd.f32 %v427, %v494
        %v527 = vadd.f32 %v428, %v495
        %v528 = vadd.f32 %v429, %v496
        %v529 = vadd.f32 %v430, %v497
        %v530 = vadd.f32 %v431, %v498
        %v531 = vadd.f32 %v432, %v499
        %v532 = vadd.f32 %v433, %v500
        %s533 = sld [smem:[#allocation2 + $0x2]]
        %s534 = scalar_lea.vmem %s306, 512 [#allocation6]
        %v535 = vld [vmem:[%s534] sm:$0xff]
        %v536 = vld [vmem:[%s534 + $0x8] sm:$0xff]
        %v537 = vld [vmem:[%s534 + $0x10] sm:$0xff]
        %v538 = vld [vmem:[%s534 + $0x18] sm:$0xff]
        %v539 = vld [vmem:[%s534 + $0x20] sm:$0xff]
        %v540 = vld [vmem:[%s534 + $0x28] sm:$0xff]
        %v541 = vld [vmem:[%s534 + $0x30] sm:$0xff]
        %v542 = vld [vmem:[%s534 + $0x38] sm:$0xff]
        %v543 = vld [vmem:[%s534 + $0x40] sm:$0xff]
        %v544 = vld [vmem:[%s534 + $0x48] sm:$0xff]
        %v545 = vld [vmem:[%s534 + $0x50] sm:$0xff]
        %v546 = vld [vmem:[%s534 + $0x58] sm:$0xff]
        %v547 = vld [vmem:[%s534 + $0x60] sm:$0xff]
        %v548 = vld [vmem:[%s534 + $0x68] sm:$0xff]
        %v549 = vld [vmem:[%s534 + $0x70] sm:$0xff]
        %v550 = vld [vmem:[%s534 + $0x78] sm:$0xff]
        %v551 = vld [vmem:[%s534 + $0x80] sm:$0xff]
        %v552 = vld [vmem:[%s534 + $0x88] sm:$0xff]
        %v553 = vld [vmem:[%s534 + $0x90] sm:$0xff]
        %v554 = vld [vmem:[%s534 + $0x98] sm:$0xff]
        %v555 = vld [vmem:[%s534 + $0xa0] sm:$0xff]
        %v556 = vld [vmem:[%s534 + $0xa8] sm:$0xff]
        %v557 = vld [vmem:[%s534 + $0xb0] sm:$0xff]
        %v558 = vld [vmem:[%s534 + $0xb8] sm:$0xff]
        %v559 = vld [vmem:[%s534 + $0xc0] sm:$0xff]
        %v560 = vld [vmem:[%s534 + $0xc8] sm:$0xff]
        %v561 = vld [vmem:[%s534 + $0xd0] sm:$0xff]
        %v562 = vld [vmem:[%s534 + $0xd8] sm:$0xff]
        %v563 = vld [vmem:[%s534 + $0xe0] sm:$0xff]
        %v564 = vld [vmem:[%s534 + $0xe8] sm:$0xff]
        %v565 = vld [vmem:[%s534 + $0xf0] sm:$0xff]
        %v566 = vld [vmem:[%s534 + $0xf8] sm:$0xff]
        %v567 = vstv %s533
        %v568 = vmul.f32 %v567, %v535
        %v569 = vmul.f32 %v567, %v536
        %v570 = vmul.f32 %v567, %v537
        %v571 = vmul.f32 %v567, %v538
        %v572 = vmul.f32 %v567, %v539
        %v573 = vmul.f32 %v567, %v540
        %v574 = vmul.f32 %v567, %v541
        %v575 = vmul.f32 %v567, %v542
        %v576 = vmul.f32 %v567, %v543
        %v577 = vmul.f32 %v567, %v544
        %v578 = vmul.f32 %v567, %v545
        %v579 = vmul.f32 %v567, %v546
        %v580 = vmul.f32 %v567, %v547
        %v581 = vmul.f32 %v567, %v548
        %v582 = vmul.f32 %v567, %v549
        %v583 = vmul.f32 %v567, %v550
        %v584 = vmul.f32 %v567, %v551
        %v585 = vmul.f32 %v567, %v552
        %v586 = vmul.f32 %v567, %v553
        %v587 = vmul.f32 %v567, %v554
        %v588 = vmul.f32 %v567, %v555
        %v589 = vmul.f32 %v567, %v556
        %v590 = vmul.f32 %v567, %v557
        %v591 = vmul.f32 %v567, %v558
        %v592 = vmul.f32 %v567, %v559
        %v593 = vmul.f32 %v567, %v560
        %v594 = vmul.f32 %v567, %v561
        %v595 = vmul.f32 %v567, %v562
        %v596 = vmul.f32 %v567, %v563
        %v597 = vmul.f32 %v567, %v564
        %v598 = vmul.f32 %v567, %v565
        %v599 = vmul.f32 %v567, %v566
        %v600 = vadd.f32 %v501, %v568
        %v601 = vadd.f32 %v502, %v569
        %v602 = vadd.f32 %v503, %v570
        %v603 = vadd.f32 %v504, %v571
        %v604 = vadd.f32 %v505, %v572
        %v605 = vadd.f32 %v506, %v573
        %v606 = vadd.f32 %v507, %v574
        %v607 = vadd.f32 %v508, %v575
        %v608 = vadd.f32 %v509, %v576
        %v609 = vadd.f32 %v510, %v577
        %v610 = vadd.f32 %v511, %v578
        %v611 = vadd.f32 %v512, %v579
        %v612 = vadd.f32 %v513, %v580
        %v613 = vadd.f32 %v514, %v581
        %v614 = vadd.f32 %v515, %v582
        %v615 = vadd.f32 %v516, %v583
        %v616 = vadd.f32 %v517, %v584
        %v617 = vadd.f32 %v518, %v585
        %v618 = vadd.f32 %v519, %v586
        %v619 = vadd.f32 %v520, %v587
        %v620 = vadd.f32 %v521, %v588
        %v621 = vadd.f32 %v522, %v589
        %v622 = vadd.f32 %v523, %v590
        %v623 = vadd.f32 %v524, %v591
        %v624 = vadd.f32 %v525, %v592
        %v625 = vadd.f32 %v526, %v593
        %v626 = vadd.f32 %v527, %v594
        %v627 = vadd.f32 %v528, %v595
        %v628 = vadd.f32 %v529, %v596
        %v629 = vadd.f32 %v530, %v597
        %v630 = vadd.f32 %v531, %v598
        %v631 = vadd.f32 %v532, %v599
        %s632 = sld [smem:[#allocation2 + $0x3]]
        %s633 = scalar_lea.vmem %s306, 768 [#allocation6]
        %v634 = vld [vmem:[%s633] sm:$0xff]
        %v635 = vld [vmem:[%s633 + $0x8] sm:$0xff]
        %v636 = vld [vmem:[%s633 + $0x10] sm:$0xff]
        %v637 = vld [vmem:[%s633 + $0x18] sm:$0xff]
        %v638 = vld [vmem:[%s633 + $0x20] sm:$0xff]
        %v639 = vld [vmem:[%s633 + $0x28] sm:$0xff]
        %v640 = vld [vmem:[%s633 + $0x30] sm:$0xff]
        %v641 = vld [vmem:[%s633 + $0x38] sm:$0xff]
        %v642 = vld [vmem:[%s633 + $0x40] sm:$0xff]
        %v643 = vld [vmem:[%s633 + $0x48] sm:$0xff]
        %v644 = vld [vmem:[%s633 + $0x50] sm:$0xff]
        %v645 = vld [vmem:[%s633 + $0x58] sm:$0xff]
        %v646 = vld [vmem:[%s633 + $0x60] sm:$0xff]
        %v647 = vld [vmem:[%s633 + $0x68] sm:$0xff]
        %v648 = vld [vmem:[%s633 + $0x70] sm:$0xff]
        %v649 = vld [vmem:[%s633 + $0x78] sm:$0xff]
        %v650 = vld [vmem:[%s633 + $0x80] sm:$0xff]
        %v651 = vld [vmem:[%s633 + $0x88] sm:$0xff]
        %v652 = vld [vmem:[%s633 + $0x90] sm:$0xff]
        %v653 = vld [vmem:[%s633 + $0x98] sm:$0xff]
        %v654 = vld [vmem:[%s633 + $0xa0] sm:$0xff]
        %v655 = vld [vmem:[%s633 + $0xa8] sm:$0xff]
        %v656 = vld [vmem:[%s633 + $0xb0] sm:$0xff]
        %v657 = vld [vmem:[%s633 + $0xb8] sm:$0xff]
        %v658 = vld [vmem:[%s633 + $0xc0] sm:$0xff]
        %v659 = vld [vmem:[%s633 + $0xc8] sm:$0xff]
        %v660 = vld [vmem:[%s633 + $0xd0] sm:$0xff]
        %v661 = vld [vmem:[%s633 + $0xd8] sm:$0xff]
        %v662 = vld [vmem:[%s633 + $0xe0] sm:$0xff]
        %v663 = vld [vmem:[%s633 + $0xe8] sm:$0xff]
        %v664 = vld [vmem:[%s633 + $0xf0] sm:$0xff]
        %v665 = vld [vmem:[%s633 + $0xf8] sm:$0xff]
        %v666 = vstv %s632
        %v667 = vmul.f32 %v666, %v634
        %v668 = vmul.f32 %v666, %v635
        %v669 = vmul.f32 %v666, %v636
        %v670 = vmul.f32 %v666, %v637
        %v671 = vmul.f32 %v666, %v638
        %v672 = vmul.f32 %v666, %v639
        %v673 = vmul.f32 %v666, %v640
        %v674 = vmul.f32 %v666, %v641
        %v675 = vmul.f32 %v666, %v642
        %v676 = vmul.f32 %v666, %v643
        %v677 = vmul.f32 %v666, %v644
        %v678 = vmul.f32 %v666, %v645
        %v679 = vmul.f32 %v666, %v646
        %v680 = vmul.f32 %v666, %v647
        %v681 = vmul.f32 %v666, %v648
        %v682 = vmul.f32 %v666, %v649
        %v683 = vmul.f32 %v666, %v650
        %v684 = vmul.f32 %v666, %v651
        %v685 = vmul.f32 %v666, %v652
        %v686 = vmul.f32 %v666, %v653
        %v687 = vmul.f32 %v666, %v654
        %v688 = vmul.f32 %v666, %v655
        %v689 = vmul.f32 %v666, %v656
        %v690 = vmul.f32 %v666, %v657
        %v691 = vmul.f32 %v666, %v658
        %v692 = vmul.f32 %v666, %v659
        %v693 = vmul.f32 %v666, %v660
        %v694 = vmul.f32 %v666, %v661
        %v695 = vmul.f32 %v666, %v662
        %v696 = vmul.f32 %v666, %v663
        %v697 = vmul.f32 %v666, %v664
        %v698 = vmul.f32 %v666, %v665
        %v699 = vadd.f32 %v600, %v667
        %v700 = vadd.f32 %v601, %v668
        %v701 = vadd.f32 %v602, %v669
        %v702 = vadd.f32 %v603, %v670
        %v703 = vadd.f32 %v604, %v671
        %v704 = vadd.f32 %v605, %v672
        %v705 = vadd.f32 %v606, %v673
        %v706 = vadd.f32 %v607, %v674
        %v707 = vadd.f32 %v608, %v675
        %v708 = vadd.f32 %v609, %v676
        %v709 = vadd.f32 %v610, %v677
        %v710 = vadd.f32 %v611, %v678
        %v711 = vadd.f32 %v612, %v679
        %v712 = vadd.f32 %v613, %v680
        %v713 = vadd.f32 %v614, %v681
        %v714 = vadd.f32 %v615, %v682
        %v715 = vadd.f32 %v616, %v683
        %v716 = vadd.f32 %v617, %v684
        %v717 = vadd.f32 %v618, %v685
        %v718 = vadd.f32 %v619, %v686
        %v719 = vadd.f32 %v620, %v687
        %v720 = vadd.f32 %v621, %v688
        %v721 = vadd.f32 %v622, %v689
        %v722 = vadd.f32 %v623, %v690
        %v723 = vadd.f32 %v624, %v691
        %v724 = vadd.f32 %v625, %v692
        %v725 = vadd.f32 %v626, %v693
        %v726 = vadd.f32 %v627, %v694
        %v727 = vadd.f32 %v628, %v695
        %v728 = vadd.f32 %v629, %v696
        %v729 = vadd.f32 %v630, %v697
        %v730 = vadd.f32 %v631, %v698
        %s731 = sld [smem:[#allocation2 + $0x4]]
        %s732 = scalar_lea.vmem %s306, 1024 [#allocation6]
        %v733 = vld [vmem:[%s732] sm:$0xff]
        %v734 = vld [vmem:[%s732 + $0x8] sm:$0xff]
        %v735 = vld [vmem:[%s732 + $0x10] sm:$0xff]
        %v736 = vld [vmem:[%s732 + $0x18] sm:$0xff]
        %v737 = vld [vmem:[%s732 + $0x20] sm:$0xff]
        %v738 = vld [vmem:[%s732 + $0x28] sm:$0xff]
        %v739 = vld [vmem:[%s732 + $0x30] sm:$0xff]
        %v740 = vld [vmem:[%s732 + $0x38] sm:$0xff]
        %v741 = vld [vmem:[%s732 + $0x40] sm:$0xff]
        %v742 = vld [vmem:[%s732 + $0x48] sm:$0xff]
        %v743 = vld [vmem:[%s732 + $0x50] sm:$0xff]
        %v744 = vld [vmem:[%s732 + $0x58] sm:$0xff]
        %v745 = vld [vmem:[%s732 + $0x60] sm:$0xff]
        %v746 = vld [vmem:[%s732 + $0x68] sm:$0xff]
        %v747 = vld [vmem:[%s732 + $0x70] sm:$0xff]
        %v748 = vld [vmem:[%s732 + $0x78] sm:$0xff]
        %v749 = vld [vmem:[%s732 + $0x80] sm:$0xff]
        %v750 = vld [vmem:[%s732 + $0x88] sm:$0xff]
        %v751 = vld [vmem:[%s732 + $0x90] sm:$0xff]
        %v752 = vld [vmem:[%s732 + $0x98] sm:$0xff]
        %v753 = vld [vmem:[%s732 + $0xa0] sm:$0xff]
        %v754 = vld [vmem:[%s732 + $0xa8] sm:$0xff]
        %v755 = vld [vmem:[%s732 + $0xb0] sm:$0xff]
        %v756 = vld [vmem:[%s732 + $0xb8] sm:$0xff]
        %v757 = vld [vmem:[%s732 + $0xc0] sm:$0xff]
        %v758 = vld [vmem:[%s732 + $0xc8] sm:$0xff]
        %v759 = vld [vmem:[%s732 + $0xd0] sm:$0xff]
        %v760 = vld [vmem:[%s732 + $0xd8] sm:$0xff]
        %v761 = vld [vmem:[%s732 + $0xe0] sm:$0xff]
        %v762 = vld [vmem:[%s732 + $0xe8] sm:$0xff]
        %v763 = vld [vmem:[%s732 + $0xf0] sm:$0xff]
        %v764 = vld [vmem:[%s732 + $0xf8] sm:$0xff]
        %v765 = vstv %s731
        %v766 = vmul.f32 %v765, %v733
        %v767 = vmul.f32 %v765, %v734
        %v768 = vmul.f32 %v765, %v735
        %v769 = vmul.f32 %v765, %v736
        %v770 = vmul.f32 %v765, %v737
        %v771 = vmul.f32 %v765, %v738
        %v772 = vmul.f32 %v765, %v739
        %v773 = vmul.f32 %v765, %v740
        %v774 = vmul.f32 %v765, %v741
        %v775 = vmul.f32 %v765, %v742
        %v776 = vmul.f32 %v765, %v743
        %v777 = vmul.f32 %v765, %v744
        %v778 = vmul.f32 %v765, %v745
        %v779 = vmul.f32 %v765, %v746
        %v780 = vmul.f32 %v765, %v747
        %v781 = vmul.f32 %v765, %v748
        %v782 = vmul.f32 %v765, %v749
        %v783 = vmul.f32 %v765, %v750
        %v784 = vmul.f32 %v765, %v751
        %v785 = vmul.f32 %v765, %v752
        %v786 = vmul.f32 %v765, %v753
        %v787 = vmul.f32 %v765, %v754
        %v788 = vmul.f32 %v765, %v755
        %v789 = vmul.f32 %v765, %v756
        %v790 = vmul.f32 %v765, %v757
        %v791 = vmul.f32 %v765, %v758
        %v792 = vmul.f32 %v765, %v759
        %v793 = vmul.f32 %v765, %v760
        %v794 = vmul.f32 %v765, %v761
        %v795 = vmul.f32 %v765, %v762
        %v796 = vmul.f32 %v765, %v763
        %v797 = vmul.f32 %v765, %v764
        %v798 = vadd.f32 %v699, %v766
        %v799 = vadd.f32 %v700, %v767
        %v800 = vadd.f32 %v701, %v768
        %v801 = vadd.f32 %v702, %v769
        %v802 = vadd.f32 %v703, %v770
        %v803 = vadd.f32 %v704, %v771
        %v804 = vadd.f32 %v705, %v772
        %v805 = vadd.f32 %v706, %v773
        %v806 = vadd.f32 %v707, %v774
        %v807 = vadd.f32 %v708, %v775
        %v808 = vadd.f32 %v709, %v776
        %v809 = vadd.f32 %v710, %v777
        %v810 = vadd.f32 %v711, %v778
        %v811 = vadd.f32 %v712, %v779
        %v812 = vadd.f32 %v713, %v780
        %v813 = vadd.f32 %v714, %v781
        %v814 = vadd.f32 %v715, %v782
        %v815 = vadd.f32 %v716, %v783
        %v816 = vadd.f32 %v717, %v784
        %v817 = vadd.f32 %v718, %v785
        %v818 = vadd.f32 %v719, %v786
        %v819 = vadd.f32 %v720, %v787
        %v820 = vadd.f32 %v721, %v788
        %v821 = vadd.f32 %v722, %v789
        %v822 = vadd.f32 %v723, %v790
        %v823 = vadd.f32 %v724, %v791
        %v824 = vadd.f32 %v725, %v792
        %v825 = vadd.f32 %v726, %v793
        %v826 = vadd.f32 %v727, %v794
        %v827 = vadd.f32 %v728, %v795
        %v828 = vadd.f32 %v729, %v796
        %v829 = vadd.f32 %v730, %v797
        %v830 = vld [vmem:[%s366] sm:$0xff]
        %v831 = vld [vmem:[%s366 + $0x8] sm:$0xff]
        %v832 = vld [vmem:[%s366 + $0x10] sm:$0xff]
        %v833 = vld [vmem:[%s366 + $0x18] sm:$0xff]
        %v834 = vld [vmem:[%s366 + $0x20] sm:$0xff]
        %v835 = vld [vmem:[%s366 + $0x28] sm:$0xff]
        %v836 = vld [vmem:[%s366 + $0x30] sm:$0xff]
        %v837 = vld [vmem:[%s366 + $0x38] sm:$0xff]
        %v838 = vld [vmem:[%s366 + $0x40] sm:$0xff]
        %v839 = vld [vmem:[%s366 + $0x48] sm:$0xff]
        %v840 = vld [vmem:[%s366 + $0x50] sm:$0xff]
        %v841 = vld [vmem:[%s366 + $0x58] sm:$0xff]
        %v842 = vld [vmem:[%s366 + $0x60] sm:$0xff]
        %v843 = vld [vmem:[%s366 + $0x68] sm:$0xff]
        %v844 = vld [vmem:[%s366 + $0x70] sm:$0xff]
        %v845 = vld [vmem:[%s366 + $0x78] sm:$0xff]
        %v846 = vld [vmem:[#allocation9] sm:$0xff]
        %v847 = vld [vmem:[#allocation9 + $0x8] sm:$0xff]
        %v848 = vld [vmem:[#allocation9 + $0x10] sm:$0xff]
        %v849 = vld [vmem:[#allocation9 + $0x18] sm:$0xff]
        %v850 = vld [vmem:[#allocation9 + $0x20] sm:$0xff]
        %v851 = vld [vmem:[#allocation9 + $0x28] sm:$0xff]
        %v852 = vld [vmem:[#allocation9 + $0x30] sm:$0xff]
        %v853 = vld [vmem:[#allocation9 + $0x38] sm:$0xff]
        %v854 = vld [vmem:[#allocation9 + $0x40] sm:$0xff]
        %v855 = vld [vmem:[#allocation9 + $0x48] sm:$0xff]
        %v856 = vld [vmem:[#allocation9 + $0x50] sm:$0xff]
        %v857 = vld [vmem:[#allocation9 + $0x58] sm:$0xff]
        %v858 = vld [vmem:[#allocation9 + $0x60] sm:$0xff]
        %v859 = vld [vmem:[#allocation9 + $0x68] sm:$0xff]
        %v860 = vld [vmem:[#allocation9 + $0x70] sm:$0xff]
        %v861 = vld [vmem:[#allocation9 + $0x78] sm:$0xff]
        %vm862 = vcmask 523264
        %v864 = vsel %vm862, %v830, 0
        %v867 = vsel %vm862, %v831, 0
        %v870 = vsel %vm862, %v832, 0
        %v873 = vsel %vm862, %v833, 0
        %v876 = vsel %vm862, %v834, 0
        %v879 = vsel %vm862, %v835, 0
        %v882 = vsel %vm862, %v836, 0
        %v885 = vsel %vm862, %v837, 0
        %v888 = vsel %vm862, %v838, 0
        %v891 = vsel %vm862, %v839, 0
        %v894 = vsel %vm862, %v840, 0
        %v897 = vsel %vm862, %v841, 0
        %v900 = vsel %vm862, %v842, 0
        %v903 = vsel %vm862, %v843, 0
        %v906 = vsel %vm862, %v844, 0
        %v909 = vsel %vm862, %v845, 0
        %911 = vmatpush.msra.mxu0 0.0
        %912 = vmatpush.msra.mxu0 0.0
        %913 = vmatpush.msra.mxu0 0.0
        %914 = vmatpush.msra.mxu0 0.0
        %915 = vmatpush.msra.mxu0 0.0
        %916 = vmatpush.msra.mxu0 0.0
        %917 = vmatpush.msra.mxu0 0.0
        %918 = vmatpush.msra.mxu0 0.0
        %919 = vmatpush.msra.mxu0 %v860
        %920 = vmatpush.msra.mxu0 %v858
        %921 = vmatpush.msra.mxu0 %v856
        %922 = vmatpush.msra.mxu0 %v854
        %923 = vmatpush.msra.mxu0 %v852
        %924 = vmatpush.msra.mxu0 %v850
        %925 = vmatpush.msra.mxu0 %v848
        %926 = vmatpush.msra.mxu0 %v846
        %927 = vmatmul.f32.gmra.mxu0 %v864
        %v928 = vpop.f32.mrf.mxu0
        %v929 = vadd.f32 0.0, %v928
        %930 = vmatmul.f32.gmra.mxu0 %v867
        %v931 = vpop.f32.mrf.mxu0
        %v932 = vadd.f32 0.0, %v931
        %933 = vmatmul.f32.gmra.mxu0 %v870
        %v934 = vpop.f32.mrf.mxu0
        %v935 = vadd.f32 0.0, %v934
        %936 = vmatmul.f32.gmra.mxu0 %v873
        %v937 = vpop.f32.mrf.mxu0
        %v938 = vadd.f32 0.0, %v937
        %939 = vmatmul.f32.gmra.mxu0 %v876
        %v940 = vpop.f32.mrf.mxu0
        %v941 = vadd.f32 0.0, %v940
        %942 = vmatmul.f32.gmra.mxu0 %v879
        %v943 = vpop.f32.mrf.mxu0
        %v944 = vadd.f32 0.0, %v943
        %945 = vmatmul.f32.gmra.mxu0 %v882
        %v946 = vpop.f32.mrf.mxu0
        %v947 = vadd.f32 0.0, %v946
        %948 = vmatmul.f32.gmra.mxu0 %v885
        %v949 = vpop.f32.mrf.mxu0
        %v950 = vadd.f32 0.0, %v949
        %951 = vmatmul.f32.gmra.mxu0 %v888
        %v952 = vpop.f32.mrf.mxu0
        %v953 = vadd.f32 0.0, %v952
        %954 = vmatmul.f32.gmra.mxu0 %v891
        %v955 = vpop.f32.mrf.mxu0
        %v956 = vadd.f32 0.0, %v955
        %957 = vmatmul.f32.gmra.mxu0 %v894
        %v958 = vpop.f32.mrf.mxu0
        %v959 = vadd.f32 0.0, %v958
        %960 = vmatmul.f32.gmra.mxu0 %v897
        %v961 = vpop.f32.mrf.mxu0
        %v962 = vadd.f32 0.0, %v961
        %963 = vmatmul.f32.gmra.mxu0 %v900
        %v964 = vpop.f32.mrf.mxu0
        %v965 = vadd.f32 0.0, %v964
        %966 = vmatmul.f32.gmra.mxu0 %v903
        %v967 = vpop.f32.mrf.mxu0
        %v968 = vadd.f32 0.0, %v967
        %969 = vmatmul.f32.gmra.mxu0 %v906
        %v970 = vpop.f32.mrf.mxu0
        %v971 = vadd.f32 0.0, %v970
        %972 = vmatmul.f32.gmra.mxu0 %v909
        %v973 = vpop.f32.mrf.mxu0
        %v974 = vadd.f32 0.0, %v973
        %975 = vdwg.mxu0
        %976 = vmatpush.msra.mxu0 0.0
        %977 = vmatpush.msra.mxu0 0.0
        %978 = vmatpush.msra.mxu0 0.0
        %979 = vmatpush.msra.mxu0 0.0
        %980 = vmatpush.msra.mxu0 0.0
        %981 = vmatpush.msra.mxu0 0.0
        %982 = vmatpush.msra.mxu0 0.0
        %983 = vmatpush.msra.mxu0 0.0
        %984 = vmatpush.msra.mxu0 %v861
        %985 = vmatpush.msra.mxu0 %v859
        %986 = vmatpush.msra.mxu0 %v857
        %987 = vmatpush.msra.mxu0 %v855
        %988 = vmatpush.msra.mxu0 %v853
        %989 = vmatpush.msra.mxu0 %v851
        %990 = vmatpush.msra.mxu0 %v849
        %991 = vmatpush.msra.mxu0 %v847
        %992 = vmatmul.f32.gmra.mxu0 %v864
        %v993 = vpop.f32.mrf.mxu0
        %v994 = vadd.f32 0.0, %v993
        %995 = vmatmul.f32.gmra.mxu0 %v867
        %v996 = vpop.f32.mrf.mxu0
        %v997 = vadd.f32 0.0, %v996
        %998 = vmatmul.f32.gmra.mxu0 %v870
        %v999 = vpop.f32.mrf.mxu0
        %v1000 = vadd.f32 0.0, %v999
        %1001 = vmatmul.f32.gmra.mxu0 %v873
        %v1002 = vpop.f32.mrf.mxu0
        %v1003 = vadd.f32 0.0, %v1002
        %1004 = vmatmul.f32.gmra.mxu0 %v876
        %v1005 = vpop.f32.mrf.mxu0
        %v1006 = vadd.f32 0.0, %v1005
        %1007 = vmatmul.f32.gmra.mxu0 %v879
        %v1008 = vpop.f32.mrf.mxu0
        %v1009 = vadd.f32 0.0, %v1008
        %1010 = vmatmul.f32.gmra.mxu0 %v882
        %v1011 = vpop.f32.mrf.mxu0
        %v1012 = vadd.f32 0.0, %v1011
        %1013 = vmatmul.f32.gmra.mxu0 %v885
        %v1014 = vpop.f32.mrf.mxu0
        %v1015 = vadd.f32 0.0, %v1014
        %1016 = vmatmul.f32.gmra.mxu0 %v888
        %v1017 = vpop.f32.mrf.mxu0
        %v1018 = vadd.f32 0.0, %v1017
        %1019 = vmatmul.f32.gmra.mxu0 %v891
        %v1020 = vpop.f32.mrf.mxu0
        %v1021 = vadd.f32 0.0, %v1020
        %1022 = vmatmul.f32.gmra.mxu0 %v894
        %v1023 = vpop.f32.mrf.mxu0
        %v1024 = vadd.f32 0.0, %v1023
        %1025 = vmatmul.f32.gmra.mxu0 %v897
        %v1026 = vpop.f32.mrf.mxu0
        %v1027 = vadd.f32 0.0, %v1026
        %1028 = vmatmul.f32.gmra.mxu0 %v900
        %v1029 = vpop.f32.mrf.mxu0
        %v1030 = vadd.f32 0.0, %v1029
        %1031 = vmatmul.f32.gmra.mxu0 %v903
        %v1032 = vpop.f32.mrf.mxu0
        %v1033 = vadd.f32 0.0, %v1032
        %1034 = vmatmul.f32.gmra.mxu0 %v906
        %v1035 = vpop.f32.mrf.mxu0
        %v1036 = vadd.f32 0.0, %v1035
        %1037 = vmatmul.f32.gmra.mxu0 %v909
        %v1038 = vpop.f32.mrf.mxu0
        %v1039 = vadd.f32 0.0, %v1038
        %1040 = vdwg.mxu0
        %v1041 = vsub.f32 0.0, %v929
        %v1042 = vsub.f32 0.0, %v994
        %v1043 = vsub.f32 0.0, %v932
        %v1044 = vsub.f32 0.0, %v997
        %v1045 = vsub.f32 0.0, %v935
        %v1046 = vsub.f32 0.0, %v1000
        %v1047 = vsub.f32 0.0, %v938
        %v1048 = vsub.f32 0.0, %v1003
        %v1049 = vsub.f32 0.0, %v941
        %v1050 = vsub.f32 0.0, %v1006
        %v1051 = vsub.f32 0.0, %v944
        %v1052 = vsub.f32 0.0, %v1009
        %v1053 = vsub.f32 0.0, %v947
        %v1054 = vsub.f32 0.0, %v1012
        %v1055 = vsub.f32 0.0, %v950
        %v1056 = vsub.f32 0.0, %v1015
        %v1057 = vsub.f32 0.0, %v953
        %v1058 = vsub.f32 0.0, %v1018
        %v1059 = vsub.f32 0.0, %v956
        %v1060 = vsub.f32 0.0, %v1021
        %v1061 = vsub.f32 0.0, %v959
        %v1062 = vsub.f32 0.0, %v1024
        %v1063 = vsub.f32 0.0, %v962
        %v1064 = vsub.f32 0.0, %v1027
        %v1065 = vsub.f32 0.0, %v965
        %v1066 = vsub.f32 0.0, %v1030
        %v1067 = vsub.f32 0.0, %v968
        %v1068 = vsub.f32 0.0, %v1033
        %v1069 = vsub.f32 0.0, %v971
        %v1070 = vsub.f32 0.0, %v1036
        %v1071 = vsub.f32 0.0, %v974
        %v1072 = vsub.f32 0.0, %v1039
        %v1073 = vmax.f32 %v1041, 0.0
        %v1074 = vmax.f32 %v1042, 0.0
        %v1075 = vmax.f32 %v1043, 0.0
        %v1076 = vmax.f32 %v1044, 0.0
        %v1077 = vmax.f32 %v1045, 0.0
        %v1078 = vmax.f32 %v1046, 0.0
        %v1079 = vmax.f32 %v1047, 0.0
        %v1080 = vmax.f32 %v1048, 0.0
        %v1081 = vmax.f32 %v1049, 0.0
        %v1082 = vmax.f32 %v1050, 0.0
        %v1083 = vmax.f32 %v1051, 0.0
        %v1084 = vmax.f32 %v1052, 0.0
        %v1085 = vmax.f32 %v1053, 0.0
        %v1086 = vmax.f32 %v1054, 0.0
        %v1087 = vmax.f32 %v1055, 0.0
        %v1088 = vmax.f32 %v1056, 0.0
        %v1089 = vmax.f32 %v1057, 0.0
        %v1090 = vmax.f32 %v1058, 0.0
        %v1091 = vmax.f32 %v1059, 0.0
        %v1092 = vmax.f32 %v1060, 0.0
        %v1093 = vmax.f32 %v1061, 0.0
        %v1094 = vmax.f32 %v1062, 0.0
        %v1095 = vmax.f32 %v1063, 0.0
        %v1096 = vmax.f32 %v1064, 0.0
        %v1097 = vmax.f32 %v1065, 0.0
        %v1098 = vmax.f32 %v1066, 0.0
        %v1099 = vmax.f32 %v1067, 0.0
        %v1100 = vmax.f32 %v1068, 0.0
        %v1101 = vmax.f32 %v1069, 0.0
        %v1102 = vmax.f32 %v1070, 0.0
        %v1103 = vmax.f32 %v1071, 0.0
        %v1104 = vmax.f32 %v1072, 0.0
        %v1105 = vand.u32 2147483647, %v929
        %v1106 = vand.u32 2147483647, %v994
        %v1107 = vand.u32 2147483647, %v932
        %v1108 = vand.u32 2147483647, %v997
        %v1109 = vand.u32 2147483647, %v935
        %v1110 = vand.u32 2147483647, %v1000
        %v1111 = vand.u32 2147483647, %v938
        %v1112 = vand.u32 2147483647, %v1003
        %v1113 = vand.u32 2147483647, %v941
        %v1114 = vand.u32 2147483647, %v1006
        %v1115 = vand.u32 2147483647, %v944
        %v1116 = vand.u32 2147483647, %v1009
        %v1117 = vand.u32 2147483647, %v947
        %v1118 = vand.u32 2147483647, %v1012
        %v1119 = vand.u32 2147483647, %v950
        %v1120 = vand.u32 2147483647, %v1015
        %v1121 = vand.u32 2147483647, %v953
        %v1122 = vand.u32 2147483647, %v1018
        %v1123 = vand.u32 2147483647, %v956
        %v1124 = vand.u32 2147483647, %v1021
        %v1125 = vand.u32 2147483647, %v959
        %v1126 = vand.u32 2147483647, %v1024
        %v1127 = vand.u32 2147483647, %v962
        %v1128 = vand.u32 2147483647, %v1027
        %v1129 = vand.u32 2147483647, %v965
        %v1130 = vand.u32 2147483647, %v1030
        %v1131 = vand.u32 2147483647, %v968
        %v1132 = vand.u32 2147483647, %v1033
        %v1133 = vand.u32 2147483647, %v971
        %v1134 = vand.u32 2147483647, %v1036
        %v1135 = vand.u32 2147483647, %v974
        %v1136 = vand.u32 2147483647, %v1039
        %v1137 = vsub.f32 0.0, %v1105
        %v1138 = vsub.f32 0.0, %v1106
        %v1139 = vsub.f32 0.0, %v1107
        %v1140 = vsub.f32 0.0, %v1108
        %v1141 = vsub.f32 0.0, %v1109
        %v1142 = vsub.f32 0.0, %v1110
        %v1143 = vsub.f32 0.0, %v1111
        %v1144 = vsub.f32 0.0, %v1112
        %v1145 = vsub.f32 0.0, %v1113
        %v1146 = vsub.f32 0.0, %v1114
        %v1147 = vsub.f32 0.0, %v1115
        %v1148 = vsub.f32 0.0, %v1116
        %v1149 = vsub.f32 0.0, %v1117
        %v1150 = vsub.f32 0.0, %v1118
        %v1151 = vsub.f32 0.0, %v1119
        %v1152 = vsub.f32 0.0, %v1120
        %v1153 = vsub.f32 0.0, %v1121
        %v1154 = vsub.f32 0.0, %v1122
        %v1155 = vsub.f32 0.0, %v1123
        %v1156 = vsub.f32 0.0, %v1124
        %v1157 = vsub.f32 0.0, %v1125
        %v1158 = vsub.f32 0.0, %v1126
        %v1159 = vsub.f32 0.0, %v1127
        %v1160 = vsub.f32 0.0, %v1128
        %v1161 = vsub.f32 0.0, %v1129
        %v1162 = vsub.f32 0.0, %v1130
        %v1163 = vsub.f32 0.0, %v1131
        %v1164 = vsub.f32 0.0, %v1132
        %v1165 = vsub.f32 0.0, %v1133
        %v1166 = vsub.f32 0.0, %v1134
        %v1167 = vsub.f32 0.0, %v1135
        %v1168 = vsub.f32 0.0, %v1136
        %v1169 = vmul.f32 %v1137, 1.442695
        %v1170 = vpow.pop %v1169
        %v1171 = vmul.f32 %v1138, 1.442695
        %v1172 = vpow.pop %v1171
        %v1173 = vmul.f32 %v1139, 1.442695
        %v1174 = vpow.pop %v1173
        %v1175 = vmul.f32 %v1140, 1.442695
        %v1176 = vpow.pop %v1175
        %v1177 = vmul.f32 %v1141, 1.442695
        %v1178 = vpow.pop %v1177
        %v1179 = vmul.f32 %v1142, 1.442695
        %v1180 = vpow.pop %v1179
        %v1181 = vmul.f32 %v1143, 1.442695
        %v1182 = vpow.pop %v1181
        %v1183 = vmul.f32 %v1144, 1.442695
        %v1184 = vpow.pop %v1183
        %v1185 = vmul.f32 %v1145, 1.442695
        %v1186 = vpow.pop %v1185
        %v1187 = vmul.f32 %v1146, 1.442695
        %v1188 = vpow.pop %v1187
        %v1189 = vmul.f32 %v1147, 1.442695
        %v1190 = vpow.pop %v1189
        %v1191 = vmul.f32 %v1148, 1.442695
        %v1192 = vpow.pop %v1191
        %v1193 = vmul.f32 %v1149, 1.442695
        %v1194 = vpow.pop %v1193
        %v1195 = vmul.f32 %v1150, 1.442695
        %v1196 = vpow.pop %v1195
        %v1197 = vmul.f32 %v1151, 1.442695
        %v1198 = vpow.pop %v1197
        %v1199 = vmul.f32 %v1152, 1.442695
        %v1200 = vpow.pop %v1199
        %v1201 = vmul.f32 %v1153, 1.442695
        %v1202 = vpow.pop %v1201
        %v1203 = vmul.f32 %v1154, 1.442695
        %v1204 = vpow.pop %v1203
        %v1205 = vmul.f32 %v1155, 1.442695
        %v1206 = vpow.pop %v1205
        %v1207 = vmul.f32 %v1156, 1.442695
        %v1208 = vpow.pop %v1207
        %v1209 = vmul.f32 %v1157, 1.442695
        %v1210 = vpow.pop %v1209
        %v1211 = vmul.f32 %v1158, 1.442695
        %v1212 = vpow.pop %v1211
        %v1213 = vmul.f32 %v1159, 1.442695
        %v1214 = vpow.pop %v1213
        %v1215 = vmul.f32 %v1160, 1.442695
        %v1216 = vpow.pop %v1215
        %v1217 = vmul.f32 %v1161, 1.442695
        %v1218 = vpow.pop %v1217
        %v1219 = vmul.f32 %v1162, 1.442695
        %v1220 = vpow.pop %v1219
        %v1221 = vmul.f32 %v1163, 1.442695
        %v1222 = vpow.pop %v1221
        %v1223 = vmul.f32 %v1164, 1.442695
        %v1224 = vpow.pop %v1223
        %v1225 = vmul.f32 %v1165, 1.442695
        %v1226 = vpow.pop %v1225
        %v1227 = vmul.f32 %v1166, 1.442695
        %v1228 = vpow.pop %v1227
        %v1229 = vmul.f32 %v1167, 1.442695
        %v1230 = vpow.pop %v1229
        %v1231 = vmul.f32 %v1168, 1.442695
        %v1232 = vpow.pop %v1231
        %v1233 = vadd.f32 %v1170, 1.0
        %v1234 = vadd.f32 %v1172, 1.0
        %v1235 = vadd.f32 %v1174, 1.0
        %v1236 = vadd.f32 %v1176, 1.0
        %v1237 = vadd.f32 %v1178, 1.0
        %v1238 = vadd.f32 %v1180, 1.0
        %v1239 = vadd.f32 %v1182, 1.0
        %v1240 = vadd.f32 %v1184, 1.0
        %v1241 = vadd.f32 %v1186, 1.0
        %v1242 = vadd.f32 %v1188, 1.0
        %v1243 = vadd.f32 %v1190, 1.0
        %v1244 = vadd.f32 %v1192, 1.0
        %v1245 = vadd.f32 %v1194, 1.0
        %v1246 = vadd.f32 %v1196, 1.0
        %v1247 = vadd.f32 %v1198, 1.0
        %v1248 = vadd.f32 %v1200, 1.0
        %v1249 = vadd.f32 %v1202, 1.0
        %v1250 = vadd.f32 %v1204, 1.0
        %v1251 = vadd.f32 %v1206, 1.0
        %v1252 = vadd.f32 %v1208, 1.0
        %v1253 = vadd.f32 %v1210, 1.0
        %v1254 = vadd.f32 %v1212, 1.0
        %v1255 = vadd.f32 %v1214, 1.0
        %v1256 = vadd.f32 %v1216, 1.0
        %v1257 = vadd.f32 %v1218, 1.0
        %v1258 = vadd.f32 %v1220, 1.0
        %v1259 = vadd.f32 %v1222, 1.0
        %v1260 = vadd.f32 %v1224, 1.0
        %v1261 = vadd.f32 %v1226, 1.0
        %v1262 = vadd.f32 %v1228, 1.0
        %v1263 = vadd.f32 %v1230, 1.0
        %v1264 = vadd.f32 %v1232, 1.0
        %v1265 = vlog2.pop %v1233
        %v1266 = vmul.f32 %v1265, 0.6931472
        %v1267 = vlog2.pop %v1234
        %v1268 = vmul.f32 %v1267, 0.6931472
        %v1269 = vlog2.pop %v1235
        %v1270 = vmul.f32 %v1269, 0.6931472
        %v1271 = vlog2.pop %v1236
        %v1272 = vmul.f32 %v1271, 0.6931472
        %v1273 = vlog2.pop %v1237
        %v1274 = vmul.f32 %v1273, 0.6931472
        %v1275 = vlog2.pop %v1238
        %v1276 = vmul.f32 %v1275, 0.6931472
        %v1277 = vlog2.pop %v1239
        %v1278 = vmul.f32 %v1277, 0.6931472
        %v1279 = vlog2.pop %v1240
        %v1280 = vmul.f32 %v1279, 0.6931472
        %v1281 = vlog2.pop %v1241
        %v1282 = vmul.f32 %v1281, 0.6931472
        %v1283 = vlog2.pop %v1242
        %v1284 = vmul.f32 %v1283, 0.6931472
        %v1285 = vlog2.pop %v1243
        %v1286 = vmul.f32 %v1285, 0.6931472
        %v1287 = vlog2.pop %v1244
        %v1288 = vmul.f32 %v1287, 0.6931472
        %v1289 = vlog2.pop %v1245
        %v1290 = vmul.f32 %v1289, 0.6931472
        %v1291 = vlog2.pop %v1246
        %v1292 = vmul.f32 %v1291, 0.6931472
        %v1293 = vlog2.pop %v1247
        %v1294 = vmul.f32 %v1293, 0.6931472
        %v1295 = vlog2.pop %v1248
        %v1296 = vmul.f32 %v1295, 0.6931472
        %v1297 = vlog2.pop %v1249
        %v1298 = vmul.f32 %v1297, 0.6931472
        %v1299 = vlog2.pop %v1250
        %v1300 = vmul.f32 %v1299, 0.6931472
        %v1301 = vlog2.pop %v1251
        %v1302 = vmul.f32 %v1301, 0.6931472
        %v1303 = vlog2.pop %v1252
        %v1304 = vmul.f32 %v1303, 0.6931472
        %v1305 = vlog2.pop %v1253
        %v1306 = vmul.f32 %v1305, 0.6931472
        %v1307 = vlog2.pop %v1254
        %v1308 = vmul.f32 %v1307, 0.6931472
        %v1309 = vlog2.pop %v1255
        %v1310 = vmul.f32 %v1309, 0.6931472
        %v1311 = vlog2.pop %v1256
        %v1312 = vmul.f32 %v1311, 0.6931472
        %v1313 = vlog2.pop %v1257
        %v1314 = vmul.f32 %v1313, 0.6931472
        %v1315 = vlog2.pop %v1258
        %v1316 = vmul.f32 %v1315, 0.6931472
        %v1317 = vlog2.pop %v1259
        %v1318 = vmul.f32 %v1317, 0.6931472
        %v1319 = vlog2.pop %v1260
        %v1320 = vmul.f32 %v1319, 0.6931472
        %v1321 = vlog2.pop %v1261
        %v1322 = vmul.f32 %v1321, 0.6931472
        %v1323 = vlog2.pop %v1262
        %v1324 = vmul.f32 %v1323, 0.6931472
        %v1325 = vlog2.pop %v1263
        %v1326 = vmul.f32 %v1325, 0.6931472
        %v1327 = vlog2.pop %v1264
        %v1328 = vmul.f32 %v1327, 0.6931472
        %v1329 = vadd.f32 %v1073, %v1266
        %v1330 = vadd.f32 %v1074, %v1268
        %v1331 = vadd.f32 %v1075, %v1270
        %v1332 = vadd.f32 %v1076, %v1272
        %v1333 = vadd.f32 %v1077, %v1274
        %v1334 = vadd.f32 %v1078, %v1276
        %v1335 = vadd.f32 %v1079, %v1278
        %v1336 = vadd.f32 %v1080, %v1280
        %v1337 = vadd.f32 %v1081, %v1282
        %v1338 = vadd.f32 %v1082, %v1284
        %v1339 = vadd.f32 %v1083, %v1286
        %v1340 = vadd.f32 %v1084, %v1288
        %v1341 = vadd.f32 %v1085, %v1290
        %v1342 = vadd.f32 %v1086, %v1292
        %v1343 = vadd.f32 %v1087, %v1294
        %v1344 = vadd.f32 %v1088, %v1296
        %v1345 = vadd.f32 %v1089, %v1298
        %v1346 = vadd.f32 %v1090, %v1300
        %v1347 = vadd.f32 %v1091, %v1302
        %v1348 = vadd.f32 %v1092, %v1304
        %v1349 = vadd.f32 %v1093, %v1306
        %v1350 = vadd.f32 %v1094, %v1308
        %v1351 = vadd.f32 %v1095, %v1310
        %v1352 = vadd.f32 %v1096, %v1312
        %v1353 = vadd.f32 %v1097, %v1314
        %v1354 = vadd.f32 %v1098, %v1316
        %v1355 = vadd.f32 %v1099, %v1318
        %v1356 = vadd.f32 %v1100, %v1320
        %v1357 = vadd.f32 %v1101, %v1322
        %v1358 = vadd.f32 %v1102, %v1324
        %v1359 = vadd.f32 %v1103, %v1326
        %v1360 = vadd.f32 %v1104, %v1328
        %v1361 = vld [vmem:[%s316] sm:$0xff]
        %v1362 = vld [vmem:[%s316 + $0x8] sm:$0xff]
        %v1363 = vld [vmem:[%s316 + $0x10] sm:$0xff]
        %v1364 = vld [vmem:[%s316 + $0x18] sm:$0xff]
        %v1365 = vld [vmem:[%s316 + $0x20] sm:$0xff]
        %v1366 = vld [vmem:[%s316 + $0x28] sm:$0xff]
        %v1367 = vld [vmem:[%s316 + $0x30] sm:$0xff]
        %v1368 = vld [vmem:[%s316 + $0x38] sm:$0xff]
        %v1369 = vld [vmem:[%s316 + $0x40] sm:$0xff]
        %v1370 = vld [vmem:[%s316 + $0x48] sm:$0xff]
        %v1371 = vld [vmem:[%s316 + $0x50] sm:$0xff]
        %v1372 = vld [vmem:[%s316 + $0x58] sm:$0xff]
        %v1373 = vld [vmem:[%s316 + $0x60] sm:$0xff]
        %v1374 = vld [vmem:[%s316 + $0x68] sm:$0xff]
        %v1375 = vld [vmem:[%s316 + $0x70] sm:$0xff]
        %v1376 = vld [vmem:[%s316 + $0x78] sm:$0xff]
        %v1377 = vunpack.c.l.bf16 %v1361
        %v1378 = vunpack.c.h.bf16 %v1361
        %v1379 = vunpack.c.l.bf16 %v1362
        %v1380 = vunpack.c.h.bf16 %v1362
        %v1381 = vunpack.c.l.bf16 %v1363
        %v1382 = vunpack.c.h.bf16 %v1363
        %v1383 = vunpack.c.l.bf16 %v1364
        %v1384 = vunpack.c.h.bf16 %v1364
        %v1385 = vunpack.c.l.bf16 %v1365
        %v1386 = vunpack.c.h.bf16 %v1365
        %v1387 = vunpack.c.l.bf16 %v1366
        %v1388 = vunpack.c.h.bf16 %v1366
        %v1389 = vunpack.c.l.bf16 %v1367
        %v1390 = vunpack.c.h.bf16 %v1367
        %v1391 = vunpack.c.l.bf16 %v1368
        %v1392 = vunpack.c.h.bf16 %v1368
        %v1393 = vunpack.c.l.bf16 %v1369
        %v1394 = vunpack.c.h.bf16 %v1369
        %v1395 = vunpack.c.l.bf16 %v1370
        %v1396 = vunpack.c.h.bf16 %v1370
        %v1397 = vunpack.c.l.bf16 %v1371
        %v1398 = vunpack.c.h.bf16 %v1371
        %v1399 = vunpack.c.l.bf16 %v1372
        %v1400 = vunpack.c.h.bf16 %v1372
        %v1401 = vunpack.c.l.bf16 %v1373
        %v1402 = vunpack.c.h.bf16 %v1373
        %v1403 = vunpack.c.l.bf16 %v1374
        %v1404 = vunpack.c.h.bf16 %v1374
        %v1405 = vunpack.c.l.bf16 %v1375
        %v1406 = vunpack.c.h.bf16 %v1375
        %v1407 = vunpack.c.l.bf16 %v1376
        %v1408 = vunpack.c.h.bf16 %v1376
        %v1409 = vmul.f32 %v798, %v1329
        %v1410 = vmul.f32 %v799, %v1330
        %v1411 = vmul.f32 %v800, %v1331
        %v1412 = vmul.f32 %v801, %v1332
        %v1413 = vmul.f32 %v802, %v1333
        %v1414 = vmul.f32 %v803, %v1334
        %v1415 = vmul.f32 %v804, %v1335
        %v1416 = vmul.f32 %v805, %v1336
        %v1417 = vmul.f32 %v806, %v1337
        %v1418 = vmul.f32 %v807, %v1338
        %v1419 = vmul.f32 %v808, %v1339
        %v1420 = vmul.f32 %v809, %v1340
        %v1421 = vmul.f32 %v810, %v1341
        %v1422 = vmul.f32 %v811, %v1342
        %v1423 = vmul.f32 %v812, %v1343
        %v1424 = vmul.f32 %v813, %v1344
        %v1425 = vmul.f32 %v814, %v1345
        %v1426 = vmul.f32 %v815, %v1346
        %v1427 = vmul.f32 %v816, %v1347
        %v1428 = vmul.f32 %v817, %v1348
        %v1429 = vmul.f32 %v818, %v1349
        %v1430 = vmul.f32 %v819, %v1350
        %v1431 = vmul.f32 %v820, %v1351
        %v1432 = vmul.f32 %v821, %v1352
        %v1433 = vmul.f32 %v822, %v1353
        %v1434 = vmul.f32 %v823, %v1354
        %v1435 = vmul.f32 %v824, %v1355
        %v1436 = vmul.f32 %v825, %v1356
        %v1437 = vmul.f32 %v826, %v1357
        %v1438 = vmul.f32 %v827, %v1358
        %v1439 = vmul.f32 %v828, %v1359
        %v1440 = vmul.f32 %v829, %v1360
        %v1441 = vadd.f32 %v929, %v1329
        %v1442 = vadd.f32 %v994, %v1330
        %v1443 = vadd.f32 %v932, %v1331
        %v1444 = vadd.f32 %v997, %v1332
        %v1445 = vadd.f32 %v935, %v1333
        %v1446 = vadd.f32 %v1000, %v1334
        %v1447 = vadd.f32 %v938, %v1335
        %v1448 = vadd.f32 %v1003, %v1336
        %v1449 = vadd.f32 %v941, %v1337
        %v1450 = vadd.f32 %v1006, %v1338
        %v1451 = vadd.f32 %v944, %v1339
        %v1452 = vadd.f32 %v1009, %v1340
        %v1453 = vadd.f32 %v947, %v1341
        %v1454 = vadd.f32 %v1012, %v1342
        %v1455 = vadd.f32 %v950, %v1343
        %v1456 = vadd.f32 %v1015, %v1344
        %v1457 = vadd.f32 %v953, %v1345
        %v1458 = vadd.f32 %v1018, %v1346
        %v1459 = vadd.f32 %v956, %v1347
        %v1460 = vadd.f32 %v1021, %v1348
        %v1461 = vadd.f32 %v959, %v1349
        %v1462 = vadd.f32 %v1024, %v1350
        %v1463 = vadd.f32 %v962, %v1351
        %v1464 = vadd.f32 %v1027, %v1352
        %v1465 = vadd.f32 %v965, %v1353
        %v1466 = vadd.f32 %v1030, %v1354
        %v1467 = vadd.f32 %v968, %v1355
        %v1468 = vadd.f32 %v1033, %v1356
        %v1469 = vadd.f32 %v971, %v1357
        %v1470 = vadd.f32 %v1036, %v1358
        %v1471 = vadd.f32 %v974, %v1359
        %v1472 = vadd.f32 %v1039, %v1360
        %v1473 = vmul.f32 %v1377, %v1441
        %v1474 = vmul.f32 %v1378, %v1442
        %v1475 = vmul.f32 %v1379, %v1443
        %v1476 = vmul.f32 %v1380, %v1444
        %v1477 = vmul.f32 %v1381, %v1445
        %v1478 = vmul.f32 %v1382, %v1446
        %v1479 = vmul.f32 %v1383, %v1447
        %v1480 = vmul.f32 %v1384, %v1448
        %v1481 = vmul.f32 %v1385, %v1449
        %v1482 = vmul.f32 %v1386, %v1450
        %v1483 = vmul.f32 %v1387, %v1451
        %v1484 = vmul.f32 %v1388, %v1452
        %v1485 = vmul.f32 %v1389, %v1453
        %v1486 = vmul.f32 %v1390, %v1454
        %v1487 = vmul.f32 %v1391, %v1455
        %v1488 = vmul.f32 %v1392, %v1456
        %v1489 = vmul.f32 %v1393, %v1457
        %v1490 = vmul.f32 %v1394, %v1458
        %v1491 = vmul.f32 %v1395, %v1459
        %v1492 = vmul.f32 %v1396, %v1460
        %v1493 = vmul.f32 %v1397, %v1461
        %v1494 = vmul.f32 %v1398, %v1462
        %v1495 = vmul.f32 %v1399, %v1463
        %v1496 = vmul.f32 %v1400, %v1464
        %v1497 = vmul.f32 %v1401, %v1465
        %v1498 = vmul.f32 %v1402, %v1466
        %v1499 = vmul.f32 %v1403, %v1467
        %v1500 = vmul.f32 %v1404, %v1468
        %v1501 = vmul.f32 %v1405, %v1469
        %v1502 = vmul.f32 %v1406, %v1470
        %v1503 = vmul.f32 %v1407, %v1471
        %v1504 = vmul.f32 %v1408, %v1472
        %v1505 = vadd.f32 %v1409, %v1473
        %v1506 = vadd.f32 %v1410, %v1474
        %v1507 = vadd.f32 %v1411, %v1475
        %v1508 = vadd.f32 %v1412, %v1476
        %v1509 = vadd.f32 %v1413, %v1477
        %v1510 = vadd.f32 %v1414, %v1478
        %v1511 = vadd.f32 %v1415, %v1479
        %v1512 = vadd.f32 %v1416, %v1480
        %v1513 = vadd.f32 %v1417, %v1481
        %v1514 = vadd.f32 %v1418, %v1482
        %v1515 = vadd.f32 %v1419, %v1483
        %v1516 = vadd.f32 %v1420, %v1484
        %v1517 = vadd.f32 %v1421, %v1485
        %v1518 = vadd.f32 %v1422, %v1486
        %v1519 = vadd.f32 %v1423, %v1487
        %v1520 = vadd.f32 %v1424, %v1488
        %v1521 = vadd.f32 %v1425, %v1489
        %v1522 = vadd.f32 %v1426, %v1490
        %v1523 = vadd.f32 %v1427, %v1491
        %v1524 = vadd.f32 %v1428, %v1492
        %v1525 = vadd.f32 %v1429, %v1493
        %v1526 = vadd.f32 %v1430, %v1494
        %v1527 = vadd.f32 %v1431, %v1495
        %v1528 = vadd.f32 %v1432, %v1496
        %v1529 = vadd.f32 %v1433, %v1497
        %v1530 = vadd.f32 %v1434, %v1498
        %v1531 = vadd.f32 %v1435, %v1499
        %v1532 = vadd.f32 %v1436, %v1500
        %v1533 = vadd.f32 %v1437, %v1501
        %v1534 = vadd.f32 %v1438, %v1502
        %v1535 = vadd.f32 %v1439, %v1503
        %v1536 = vadd.f32 %v1440, %v1504
        %v1537 = vand.u32 2147483647, %v1505
        %v1538 = vand.u32 2147483647, %v1506
        %v1539 = vand.u32 2147483647, %v1507
        %v1540 = vand.u32 2147483647, %v1508
        %v1541 = vand.u32 2147483647, %v1509
        %v1542 = vand.u32 2147483647, %v1510
        %v1543 = vand.u32 2147483647, %v1511
        %v1544 = vand.u32 2147483647, %v1512
        %v1545 = vand.u32 2147483647, %v1513
        %v1546 = vand.u32 2147483647, %v1514
        %v1547 = vand.u32 2147483647, %v1515
        %v1548 = vand.u32 2147483647, %v1516
        %v1549 = vand.u32 2147483647, %v1517
        %v1550 = vand.u32 2147483647, %v1518
        %v1551 = vand.u32 2147483647, %v1519
        %v1552 = vand.u32 2147483647, %v1520
        %v1553 = vand.u32 2147483647, %v1521
        %v1554 = vand.u32 2147483647, %v1522
        %v1555 = vand.u32 2147483647, %v1523
        %v1556 = vand.u32 2147483647, %v1524
        %v1557 = vand.u32 2147483647, %v1525
        %v1558 = vand.u32 2147483647, %v1526
        %v1559 = vand.u32 2147483647, %v1527
        %v1560 = vand.u32 2147483647, %v1528
        %v1561 = vand.u32 2147483647, %v1529
        %v1562 = vand.u32 2147483647, %v1530
        %v1563 = vand.u32 2147483647, %v1531
        %v1564 = vand.u32 2147483647, %v1532
        %v1565 = vand.u32 2147483647, %v1533
        %v1566 = vand.u32 2147483647, %v1534
        %v1567 = vand.u32 2147483647, %v1535
        %v1568 = vand.u32 2147483647, %v1536
        %v1569 = vadd.f32 %v1537, %v1538
        %v1570 = vadd.f32 %v1569, %v1539
        %v1571 = vadd.f32 %v1570, %v1540
        %v1572 = vadd.f32 %v1571, %v1541
        %v1573 = vadd.f32 %v1572, %v1542
        %v1574 = vadd.f32 %v1573, %v1543
        %v1575 = vadd.f32 %v1574, %v1544
        %v1576 = vadd.f32 %v1575, %v1545
        %v1577 = vadd.f32 %v1576, %v1546
        %v1578 = vadd.f32 %v1577, %v1547
        %v1579 = vadd.f32 %v1578, %v1548
        %v1580 = vadd.f32 %v1579, %v1549
        %v1581 = vadd.f32 %v1580, %v1550
        %v1582 = vadd.f32 %v1581, %v1551
        %v1583 = vadd.f32 %v1582, %v1552
        %v1584 = vadd.f32 %v1583, %v1553
        %v1585 = vadd.f32 %v1584, %v1554
        %v1586 = vadd.f32 %v1585, %v1555
        %v1587 = vadd.f32 %v1586, %v1556
        %v1588 = vadd.f32 %v1587, %v1557
        %v1589 = vadd.f32 %v1588, %v1558
        %v1590 = vadd.f32 %v1589, %v1559
        %v1591 = vadd.f32 %v1590, %v1560
        %v1592 = vadd.f32 %v1591, %v1561
        %v1593 = vadd.f32 %v1592, %v1562
        %v1594 = vadd.f32 %v1593, %v1563
        %v1595 = vadd.f32 %v1594, %v1564
        %v1596 = vadd.f32 %v1595, %v1565
        %v1597 = vadd.f32 %v1596, %v1566
        %v1598 = vadd.f32 %v1597, %v1567
        %v1599 = vadd.f32 %v1598, %v1568
        %1600 = vadd.xlane.f32.xlu0 %v1599
        %v1601 = vpop.xlane.xlu0 %1600
        %v1602 = vrot.slane %v1601, 4
        %v1603 = vadd.f32 %v1601, %v1602
        %v1604 = vrot.slane %v1603, 2
        %v1605 = vadd.f32 %v1603, %v1604
        %v1606 = vrot.slane %v1605, 1
        %v1607 = vadd.f32 %v1605, %v1606
        %s1608 = vtos %v1607
        %v1609 = vstv %s1608
        %1610 = vst [vmem:[%s359] sm:$0xff] %v1609
        %s1611 = sand.u32 %s154, 1
        %s1612 = scalar_lea.sflag [#allocation4], %s1611
        %s1613 = sand.u32 %s154, 1
        %s1614 = smul.addr %s1613, 8
        %s1615 = scalar_lea.vmem [#allocation10], %s1614
        // Predicated region
        $region57: #{tpu_custom_call.1} parent=39 // pred_check
          %p1616 = pneg %p164
        $region58: #{tpu_custom_call.1} parent=39 // pred_check_branch
          %1618 = sbr.rel (%p1616) target = $region60
        $region59: #{tpu_custom_call.1} parent=39 // pred_region
          %1620 = vsyncadd %s1612, 0
          %s1621 = smul.addr %s26, 8
          %s1622 = scalar_lea.hbm %s5, %s1621
          %s1624 = sshll.u32 %s1615, 4
          %s1625 = int_to_ptr.vmem [resolvable:$true] %s1624
          %s1626 = sshll.u32 %s1622, 4
          %s1627 = int_to_ptr.hbm [resolvable:$true] %s1626
          %1629 = dma.vmem_to_hbm [thread:$0]  %s1625, 128, %s1627, %s1612
        $region60: #{tpu_custom_call.1} parent=39 // pred_fallthru
          _
      $region40: #{tpu_custom_call.1} parent=5 // pred_fallthru
        _
      %p1630 = scmp.le.s32.totalorder 2, %s21
      // Predicated region
      $region61: #{tpu_custom_call.1} parent=5 // pred_check
        %p1631 = pneg %p1630
      $region62: #{tpu_custom_call.1} parent=5 // pred_check_branch
        %1633 = sbr.rel (%p1631) target = $region64
      $region63: #{tpu_custom_call.1} parent=5 // pred_region
        %s1634 = ssub.s32 %s21, 2
        // Predicated region
        $region65: #{tpu_custom_call.1} parent=63 // pred_check
          %p1635 = pneg %p170
        $region66: #{tpu_custom_call.1} parent=63 // pred_check_branch
          %1637 = sbr.rel (%p1635) target = $region68
        $region67: #{tpu_custom_call.1} parent=63 // pred_region
          %s1638 = sand.u32 %s155, 1
          %s1639 = scalar_lea.sflag [#allocation4], %s1638
          %s1640 = sand.u32 %s155, 1
          %s1641 = smul.addr %s1640, 8
          %s1642 = scalar_lea.vmem [#allocation10], %s1641
          %1644 = dma.done %s1639, 128
        $region68: #{tpu_custom_call.1} parent=63 // pred_fallthru
          _
      $region64: #{tpu_custom_call.1} parent=5 // pred_fallthru
        _
    $region6: #{tpu_custom_call.1} parent=1 // loop_footer
      %s25 = sadd.s32 1, %s21
    $region7: #{tpu_custom_call.1} parent=1 // loop_footer_branch
      %20 = sbr.rel target = $region3
    $region8: #{tpu_custom_call.1} parent=1 // loop_exit
      _
    %1645 = vsyncpa [#allocation3], 1
    %s1646 = scalar_lea.sflag [#allocation3], 1
    %1647 = vsyncpa %s1646, 1
    %1648 = vsyncpa [#allocation8], 1
    %s1649 = scalar_lea.sflag [#allocation8], 1
    %1650 = vsyncpa %s1649, 1
    %1651 = vsyncpa [#allocation4], 1
    %s1652 = scalar_lea.sflag [#allocation4], 1
    %1653 = vsyncpa %s1652, 1
    %1654 = vsyncpa [#allocation5], 1
    %s1655 = scalar_lea.sflag [#allocation5], 1
    %1656 = vsyncpa %s1655, 1

</llo_original>
